<compile_context>
chip_gen: v6e
topology: v6e:2x2x1
jax: 0.10.0
libtpu: 0.0.40
codegen_flags: <defaults>
</compile_context>

<pallas_src>
import numpy as np
import jax
import jax.numpy as jnp
from jax.experimental import pallas as pl
from jax.experimental.pallas import tpu as pltpu

# ----------------------------------------------------------------------------
# Static network dimensions
# ----------------------------------------------------------------------------
CIN, C1, C2 = 3, 6, 16          # channels
C1P, C2P = 8, 16                # per-pixel channel strides in the lane layout
KH = KW = 5
H0 = W0 = 32                    # input spatial
H1 = W1 = H0 - KH + 1           # 28 : conv1 output
HP1 = WP1 = H1 // 2             # 14 : pool1 output
H2 = W2 = HP1 - KH + 1          # 10 : conv2 output
HP2 = WP2 = H2 // 2             # 5  : pool2 output
F1, F2, F3 = 120, 84, 10        # fc sizes
FP = 128                        # lane-dense padded fc / output width

K1 = CIN * KH * W0              # 480 : conv1 im2col K
K1P = 512                       # padded conv1 K (lane dense)
K2P = KH * FP                   # 640 : conv2 merged K
KF1 = HP2 * FP                  # 640 : fc1 merged K

_WEIGHT_NAMES = ("t1", "b1", "t2", "b2",
                 "wf1", "bf1", "wf2", "bf2", "wf3", "bf3")


# ----------------------------------------------------------------------------
# The fused Pallas kernel (B_TILE images per grid step)
# ----------------------------------------------------------------------------
def _lenet_kernel(x_ref, t1_ref, b1_ref, t2_ref, b2_ref,
                  wf1_ref, bf1_ref, wf2_ref, bf2_ref, wf3_ref, bf3_ref,
                  out_ref):
    bt = out_ref.shape[0]          # images per grid step
    r1 = HP1 * bt                  # rows after pool1 (row = u*bt + b)
    r2 = H2 * bt                   # conv2 output rows (row = h2*bt + b)

    def mm(a, b):
        return jnp.dot(a, b, preferred_element_type=jnp.float32)

    # ---- conv1: single MXU matmul, im2col done by the wrapper --------------
    z1 = mm(x_ref[0], t1_ref[...])                              # (2*r1, 256) f32
    # pool1 rows: even/odd h1 halves were pre-split by the wrapper repack.
    a1 = jnp.maximum(jnp.maximum(z1[:r1], z1[r1:]) + b1_ref[...], 0.0)
    # pool1 cols: the two column parities live in separate 128-lane halves.
    p1 = jnp.maximum(a1[:, :FP], a1[:, FP:])                    # (r1, 128)

    # ---- conv2: KH row shifts = aligned sublane slices, merged into K ------
    lhs2 = jnp.concatenate(
        [p1[i * bt:i * bt + r2, :] for i in range(KH)], axis=1)  # (r2, 640)
    z2 = mm(lhs2.astype(jnp.bfloat16), t2_ref[...])              # (r2, 256) f32
    a2 = jnp.maximum(z2 + b2_ref[...], 0.0)
    cp = jnp.maximum(a2[:, :FP], a2[:, FP:])                     # (r2, 128)

    # ---- pool2 rows + flatten for fc1 (aligned slices + lane concat) -------
    f_in = jnp.concatenate(
        [jnp.maximum(cp[(2 * s) * bt:(2 * s + 1) * bt, :],
                     cp[(2 * s + 1) * bt:(2 * s + 2) * bt, :])
         for s in range(HP2)],
        axis=1)                                                  # (bt, 640)

    # ---- fc1 (single matmul, torch flatten order folded into weight) -------
    y = jnp.maximum(mm(f_in.astype(jnp.bfloat16), wf1_ref[...]) + bf1_ref[...],
                    0.0)                                         # (bt, 128)
    # ---- fc2 + ReLU, fc3 (tiny; kept f32) -----------------------------------
    y = jnp.maximum(mm(y, wf2_ref[...]) + bf2_ref[...], 0.0)
    out_ref[...] = mm(y, wf3_ref[...]) + bf3_ref[...]


# ----------------------------------------------------------------------------
# pallas_call wrapper (input repack / im2col done here, in plain XLA)
# ----------------------------------------------------------------------------
def lenet_forward(x_nchw, kp, b_tile=8):
    """x_nchw: (N, 3, 32, 32) float32 -> logits (N, 10).

    b_tile: images per grid step (multiple of 8).  8 fills the 128-row MXU on
    v5e; use 16-32 on v6e/v7x; on v7x keep >= 2 grid steps so both
    TensorCores get work (default 8 already does for N >= 16).
    """
    assert b_tile % 8 == 0
    n = x_nchw.shape[0]
    n_pad = ((n + b_tile - 1) // b_tile) * b_tile
    steps = n_pad // b_tile

    x = jnp.pad(x_nchw.astype(jnp.float32),
                ((0, n_pad - n), (0, 0), (0, 0), (0, 0)))

    # im2col over (C, KH) with the full W axis kept; the block-Toeplitz weight
    # absorbs the KW shifts.  lane index = c*KH*W0 + i*W0 + w0.
    rows = jnp.stack([x[:, :, i:i + H1, :] for i in range(KH)], axis=2)
    rows = rows.transpose(0, 3, 1, 2, 4).reshape(n_pad, H1, K1)   # (Np, 28, 480)
    rows = jnp.pad(rows, ((0, 0), (0, 0), (0, K1P - K1)))         # (Np, 28, 512)
    # Row reorder so that inside each grid-step block the rows are
    # [parity, u, image]:  r = parity*(14*B) + u*B + b   (h1 = 2*u + parity).
    rows = rows.reshape(steps, b_tile, HP1, 2, K1P)
    rows = rows.transpose(0, 3, 2, 1, 4).reshape(steps, 2 * HP1 * b_tile, K1P)
    rows = rows.astype(jnp.bfloat16)

    weights = [kp[k] for k in _WEIGHT_NAMES]

    def _wspec(w):
        return pl.BlockSpec(w.shape, lambda s: (0, 0))   # resident every step

    out = pl.pallas_call(
        _lenet_kernel,
        out_shape=jax.ShapeDtypeStruct((n_pad, FP), jnp.float32),
        grid=(steps,),
        in_specs=[pl.BlockSpec((1, 2 * HP1 * b_tile, K1P),
                               lambda s: (s, 0, 0))]
                 + [_wspec(w) for w in weights],
        out_specs=pl.BlockSpec((b_tile, FP), lambda s: (s, 0)),
        compiler_params=pltpu.CompilerParams(
            dimension_semantics=("parallel",)),
    )(rows, *weights)
    return out[:n, :F3]


lenet_forward = jax.jit(lenet_forward, static_argnames=("b_tile",))


# ----------------------------------------------------------------------------
# One-time host-side weight transforms (PyTorch layouts -> kernel layouts)
# ----------------------------------------------------------------------------
def _toeplitz_conv1(w1):
    """w1 (C1, CIN, KH, KW) -> (K1P, 256); out col = parity*128 + v*C1P + co."""
    t = np.zeros((K1P, 2 * FP), np.float32)
    for c in range(CIN):
        for i in range(KH):
            for j in range(KW):
                for par in range(2):
                    for v in range(WP1):
                        w0 = 2 * v + par + j
                        row = c * KH * W0 + i * W0 + w0
                        col = par * FP + v * C1P
                        t[row, col:col + C1] = w1[:, c, i, j]
    return t


def _toeplitz_conv2(w2):
    """w2 (C2, C1, KH, KW) -> (K2P, 256); in lane = i*128 + vin*C1P + ci,
    out col = parity*128 + vo*C2P + c2."""
    t = np.zeros((K2P, 2 * FP), np.float32)
    for ci in range(C1):
        for i in range(KH):
            for j in range(KW):
                for par in range(2):
                    for vo in range(WP2):
                        vin = 2 * vo + par + j
                        row = i * FP + vin * C1P + ci
                        col = par * FP + vo * C2P
                        t[row, col:col + C2] = w2[:, ci, i, j]
    return t


def _bias_conv1(b):
    v = np.zeros((1, 2 * FP), np.float32)
    for par in range(2):
        for w in range(WP1):
            v[0, par * FP + w * C1P: par * FP + w * C1P + C1] = b
    return v


def _bias_conv2(b):
    v = np.zeros((1, 2 * FP), np.float32)
    for par in range(2):
        for w in range(WP2):
            v[0, par * FP + w * C2P: par * FP + w * C2P + C2] = b
    return v


def _fc1_weight(wf1):
    """wf1 (F1, 400); torch flatten idx = c2*25 + s*5 + vo ->
    (KF1, FP) matching f_in lane = s*128 + vo*C2P + c2."""
    t = np.zeros((KF1, FP), np.float32)
    for s in range(HP2):
        for vo in range(WP2):
            for c2 in range(C2):
                t[s * FP + vo * C2P + c2, :F1] = \
                    wf1[:, c2 * HP2 * WP2 + s * WP2 + vo]
    return t


def _fc_weight(wt):
    """(out, in) torch layout -> zero-padded (FP, FP) in (in, out) order."""
    o, i = wt.shape
    t = np.zeros((FP, FP), np.float32)
    t[:i, :o] = wt.T
    return t


def _fc_bias(b):
    v = np.zeros((1, FP), np.float32)
    v[0, :b.shape[0]] = b
    return v


def prepare_kernel_params(p):
    """Expects PyTorch layouts: conv (Cout, Cin, KH, KW), linear (out, in).
    All permutations / padding / bf16 casts are absorbed here, once."""
    w1, b1 = np.asarray(p["w1"], np.float32), np.asarray(p["b1"], np.float32)
    w2, b2 = np.asarray(p["w2"], np.float32), np.asarray(p["b2"], np.float32)
    kp = {
        "t1": jnp.asarray(_toeplitz_conv1(w1), jnp.bfloat16),
        "b1": jnp.asarray(_bias_conv1(b1)),
        "t2": jnp.asarray(_toeplitz_conv2(w2), jnp.bfloat16),
        "b2": jnp.asarray(_bias_conv2(b2)),
        "wf1": jnp.asarray(_fc1_weight(np.asarray(p["wf1"], np.float32)),
                           jnp.bfloat16),
        "bf1": jnp.asarray(_fc_bias(np.asarray(p["bf1"], np.float32))),
        "wf2": jnp.asarray(_fc_weight(np.asarray(p["wf2"], np.float32))),
        "bf2": jnp.asarray(_fc_bias(np.asarray(p["bf2"], np.float32))),
        "wf3": jnp.asarray(_fc_weight(np.asarray(p["wf3"], np.float32))),
        "bf3": jnp.asarray(_fc_bias(np.asarray(p["bf3"], np.float32))),
    }
    return kp


# ----------------------------------------------------------------------------
# Deterministic PyTorch-style init + pure-JAX f32 reference for validation
# ----------------------------------------------------------------------------
def init_torch_params(key):
    ks = jax.random.split(key, 10)

    def u(k, shape, fan_in):
        bound = 1.0 / np.sqrt(fan_in)
        return jax.random.uniform(k, shape, jnp.float32, -bound, bound)

    return {
        "w1": u(ks[0], (C1, CIN, KH, KW), CIN * KH * KW),
        "b1": u(ks[1], (C1,), CIN * KH * KW),
        "w2": u(ks[2], (C2, C1, KH, KW), C1 * KH * KW),
        "b2": u(ks[3], (C2,), C1 * KH * KW),
        "wf1": u(ks[4], (F1, C2 * HP2 * WP2), C2 * HP2 * WP2),
        "bf1": u(ks[5], (F1,), C2 * HP2 * WP2),
        "wf2": u(ks[6], (F2, F1), F1),
        "bf2": u(ks[7], (F2,), F1),
        "wf3": u(ks[8], (F3, F2), F2),
        "bf3": u(ks[9], (F3,), F2),
    }


def _maxpool_nchw(x):
    n, c, h, w = x.shape
    return x.reshape(n, c, h // 2, 2, w // 2, 2).max(axis=(3, 5))


def reference_forward(x, p):
    dn = ("NCHW", "OIHW", "NCHW")
    hi = jax.lax.Precision.HIGHEST
    z = jax.lax.conv_general_dilated(x, p["w1"], (1, 1), "VALID",
                                     dimension_numbers=dn, precision=hi)
    z = jax.nn.relu(z + p["b1"][None, :, None, None])
    z = _maxpool_nchw(z)
    z = jax.lax.conv_general_dilated(z, p["w2"], (1, 1), "VALID",
                                     dimension_numbers=dn, precision=hi)
    z = jax.nn.relu(z + p["b2"][None, :, None, None])
    z = _maxpool_nchw(z)
    z = z.reshape(z.shape[0], -1)                  # == torch x.view(-1, 400)
    z = jax.nn.relu(jnp.dot(z, p["wf1"].T, precision=hi) + p["bf1"])
    z = jax.nn.relu(jnp.dot(z, p["wf2"].T, precision=hi) + p["bf2"])
    return jnp.dot(z, p["wf3"].T, precision=hi) + p["bf3"]


if __name__ == "__main__":
    key = jax.random.PRNGKey(0)
    k_x, k_par = jax.random.split(key)

    x = jax.random.normal(k_x, (2, CIN, H0, W0), dtype=jnp.float32)   # NCHW
    torch_params = init_torch_params(k_par)
    kernel_params = prepare_kernel_params(torch_params)

    out = jax.block_until_ready(lenet_forward(x, kernel_params))
    assert out.shape == (2, F3), out.shape
    assert out.dtype == jnp.float32

    ref = jax.block_until_ready(reference_forward(x, torch_params))
    # Tolerance relaxed deliberately: conv1/conv2/fc1 use bf16 MXU operands
    # (f32 accumulation); the f32 reference is computed at HIGHEST precision.
    np.testing.assert_allclose(np.asarray(out), np.asarray(ref),
                               atol=2e-2, rtol=2e-2)
    print("KERNEL_OK")
</pallas_src>

<mosaic_0001>
module attributes {stable_mosaic.version = 11 : i64} {
  func.func @_lenet_kernel(%arg0: i32, %arg1: memref<1x224x512xbf16, #tpu.memory_space<vmem>>, %arg2: memref<512x256xbf16, #tpu.memory_space<vmem>>, %arg3: memref<1x256xf32, #tpu.memory_space<vmem>>, %arg4: memref<640x256xbf16, #tpu.memory_space<vmem>>, %arg5: memref<1x256xf32, #tpu.memory_space<vmem>>, %arg6: memref<640x128xbf16, #tpu.memory_space<vmem>>, %arg7: memref<1x128xf32, #tpu.memory_space<vmem>>, %arg8: memref<128x128xf32, #tpu.memory_space<vmem>>, %arg9: memref<1x128xf32, #tpu.memory_space<vmem>>, %arg10: memref<128x128xf32, #tpu.memory_space<vmem>>, %arg11: memref<1x128xf32, #tpu.memory_space<vmem>>, %arg12: memref<8x128xf32, #tpu.memory_space<vmem>>) attributes {dimension_semantics = [#tpu.dimension_semantics<parallel>], iteration_bounds = array<i64: 1>, scalar_prefetch = 0 : i64, scratch_operands = 0 : i64, tpu.core_type = #tpu.core_type<tc>, window_params = [{transform_indices = @transform_0, window_bounds = array<i64: 1, 224, 512>}, {pipeline_mode = #tpu.pipeline_mode<synchronous>, transform_indices = @transform_1, window_bounds = array<i64: 512, 256>}, {pipeline_mode = #tpu.pipeline_mode<synchronous>, transform_indices = @transform_2, window_bounds = array<i64: 1, 256>}, {pipeline_mode = #tpu.pipeline_mode<synchronous>, transform_indices = @transform_3, window_bounds = array<i64: 640, 256>}, {pipeline_mode = #tpu.pipeline_mode<synchronous>, transform_indices = @transform_4, window_bounds = array<i64: 1, 256>}, {pipeline_mode = #tpu.pipeline_mode<synchronous>, transform_indices = @transform_5, window_bounds = array<i64: 640, 128>}, {pipeline_mode = #tpu.pipeline_mode<synchronous>, transform_indices = @transform_6, window_bounds = array<i64: 1, 128>}, {pipeline_mode = #tpu.pipeline_mode<synchronous>, transform_indices = @transform_7, window_bounds = array<i64: 128, 128>}, {pipeline_mode = #tpu.pipeline_mode<synchronous>, transform_indices = @transform_8, window_bounds = array<i64: 1, 128>}, {pipeline_mode = #tpu.pipeline_mode<synchronous>, transform_indices = @transform_9, window_bounds = array<i64: 128, 128>}, {pipeline_mode = #tpu.pipeline_mode<synchronous>, transform_indices = @transform_10, window_bounds = array<i64: 1, 128>}, {transform_indices = @transform_11, window_bounds = array<i64: 8, 128>}]} {
    %c0 = arith.constant 0 : index
    %c0_0 = arith.constant 0 : index
    %c0_1 = arith.constant 0 : index
    %0 = vector.load %arg1[%c0, %c0_0, %c0_1] : memref<1x224x512xbf16, #tpu.memory_space<vmem>>, vector<1x224x512xbf16>
    %1 = vector.shape_cast %0 : vector<1x224x512xbf16> to vector<224x512xbf16>
    %c0_2 = arith.constant 0 : index
    %c0_3 = arith.constant 0 : index
    %2 = vector.load %arg2[%c0_2, %c0_3] : memref<512x256xbf16, #tpu.memory_space<vmem>>, vector<512x256xbf16>
    %cst = arith.constant dense<0.000000e+00> : vector<224x256xf32>
    %3 = tpu.matmul %1, %2, %cst {dimension_numbers = #tpu.dot_dimension_numbers<[1], [0], [0], [1], [0, 0, 1, 1], [], []>} : vector<224x512xbf16>, vector<512x256xbf16>, vector<224x256xf32> -> vector<224x256xf32>
    %4 = vector.extract_strided_slice %3 {offsets = [0, 0], sizes = [112, 256], strides = [1, 1]} : vector<224x256xf32> to vector<112x256xf32>
    %5 = vector.extract_strided_slice %3 {offsets = [112, 0], sizes = [112, 256], strides = [1, 1]} : vector<224x256xf32> to vector<112x256xf32>
    %6 = arith.maximumf %4, %5 : vector<112x256xf32>
    %c0_4 = arith.constant 0 : index
    %c0_5 = arith.constant 0 : index
    %7 = vector.load %arg3[%c0_4, %c0_5] : memref<1x256xf32, #tpu.memory_space<vmem>>, vector<1x256xf32>
    %8 = vector.broadcast %7 : vector<1x256xf32> to vector<112x256xf32>
    %9 = arith.addf %6, %8 : vector<112x256xf32>
    %cst_6 = arith.constant 0.000000e+00 : f32
    %10 = vector.broadcast %cst_6 : f32 to vector<112x256xf32>
    %11 = arith.maximumf %9, %10 : vector<112x256xf32>
    %12 = vector.extract_strided_slice %11 {offsets = [0, 0], sizes = [112, 128], strides = [1, 1]} : vector<112x256xf32> to vector<112x128xf32>
    %13 = vector.extract_strided_slice %11 {offsets = [0, 128], sizes = [112, 128], strides = [1, 1]} : vector<112x256xf32> to vector<112x128xf32>
    %14 = arith.maximumf %12, %13 : vector<112x128xf32>
    %15 = vector.extract_strided_slice %14 {offsets = [0, 0], sizes = [80, 128], strides = [1, 1]} : vector<112x128xf32> to vector<80x128xf32>
    %16 = vector.extract_strided_slice %14 {offsets = [8, 0], sizes = [80, 128], strides = [1, 1]} : vector<112x128xf32> to vector<80x128xf32>
    %17 = vector.extract_strided_slice %14 {offsets = [16, 0], sizes = [80, 128], strides = [1, 1]} : vector<112x128xf32> to vector<80x128xf32>
    %18 = vector.extract_strided_slice %14 {offsets = [24, 0], sizes = [80, 128], strides = [1, 1]} : vector<112x128xf32> to vector<80x128xf32>
    %19 = vector.extract_strided_slice %14 {offsets = [32, 0], sizes = [80, 128], strides = [1, 1]} : vector<112x128xf32> to vector<80x128xf32>
    %20 = tpu.concatenate %15, %16, %17, %18, %19 in 1 : vector<80x128xf32>, vector<80x128xf32>, vector<80x128xf32>, vector<80x128xf32>, vector<80x128xf32> -> vector<80x640xf32>
    %21 = arith.truncf %20 : vector<80x640xf32> to vector<80x640xbf16>
    %c0_7 = arith.constant 0 : index
    %c0_8 = arith.constant 0 : index
    %22 = vector.load %arg4[%c0_7, %c0_8] : memref<640x256xbf16, #tpu.memory_space<vmem>>, vector<640x256xbf16>
    %cst_9 = arith.constant dense<0.000000e+00> : vector<80x256xf32>
    %23 = tpu.matmul %21, %22, %cst_9 {dimension_numbers = #tpu.dot_dimension_numbers<[1], [0], [0], [1], [0, 0, 1, 1], [], []>} : vector<80x640xbf16>, vector<640x256xbf16>, vector<80x256xf32> -> vector<80x256xf32>
    %c0_10 = arith.constant 0 : index
    %c0_11 = arith.constant 0 : index
    %24 = vector.load %arg5[%c0_10, %c0_11] : memref<1x256xf32, #tpu.memory_space<vmem>>, vector<1x256xf32>
    %25 = vector.broadcast %24 : vector<1x256xf32> to vector<80x256xf32>
    %26 = arith.addf %23, %25 : vector<80x256xf32>
    %cst_12 = arith.constant 0.000000e+00 : f32
    %27 = vector.broadcast %cst_12 : f32 to vector<80x256xf32>
    %28 = arith.maximumf %26, %27 : vector<80x256xf32>
    %29 = vector.extract_strided_slice %28 {offsets = [0, 0], sizes = [80, 128], strides = [1, 1]} : vector<80x256xf32> to vector<80x128xf32>
    %30 = vector.extract_strided_slice %28 {offsets = [0, 128], sizes = [80, 128], strides = [1, 1]} : vector<80x256xf32> to vector<80x128xf32>
    %31 = arith.maximumf %29, %30 : vector<80x128xf32>
    %32 = vector.extract_strided_slice %31 {offsets = [0, 0], sizes = [8, 128], strides = [1, 1]} : vector<80x128xf32> to vector<8x128xf32>
    %33 = vector.extract_strided_slice %31 {offsets = [8, 0], sizes = [8, 128], strides = [1, 1]} : vector<80x128xf32> to vector<8x128xf32>
    %34 = arith.maximumf %32, %33 : vector<8x128xf32>
    %35 = vector.extract_strided_slice %31 {offsets = [16, 0], sizes = [8, 128], strides = [1, 1]} : vector<80x128xf32> to vector<8x128xf32>
    %36 = vector.extract_strided_slice %31 {offsets = [24, 0], sizes = [8, 128], strides = [1, 1]} : vector<80x128xf32> to vector<8x128xf32>
    %37 = arith.maximumf %35, %36 : vector<8x128xf32>
    %38 = vector.extract_strided_slice %31 {offsets = [32, 0], sizes = [8, 128], strides = [1, 1]} : vector<80x128xf32> to vector<8x128xf32>
    %39 = vector.extract_strided_slice %31 {offsets = [40, 0], sizes = [8, 128], strides = [1, 1]} : vector<80x128xf32> to vector<8x128xf32>
    %40 = arith.maximumf %38, %39 : vector<8x128xf32>
    %41 = vector.extract_strided_slice %31 {offsets = [48, 0], sizes = [8, 128], strides = [1, 1]} : vector<80x128xf32> to vector<8x128xf32>
    %42 = vector.extract_strided_slice %31 {offsets = [56, 0], sizes = [8, 128], strides = [1, 1]} : vector<80x128xf32> to vector<8x128xf32>
    %43 = arith.maximumf %41, %42 : vector<8x128xf32>
    %44 = vector.extract_strided_slice %31 {offsets = [64, 0], sizes = [8, 128], strides = [1, 1]} : vector<80x128xf32> to vector<8x128xf32>
    %45 = vector.extract_strided_slice %31 {offsets = [72, 0], sizes = [8, 128], strides = [1, 1]} : vector<80x128xf32> to vector<8x128xf32>
    %46 = arith.maximumf %44, %45 : vector<8x128xf32>
    %47 = tpu.concatenate %34, %37, %40, %43, %46 in 1 : vector<8x128xf32>, vector<8x128xf32>, vector<8x128xf32>, vector<8x128xf32>, vector<8x128xf32> -> vector<8x640xf32>
    %48 = arith.truncf %47 : vector<8x640xf32> to vector<8x640xbf16>
    %c0_13 = arith.constant 0 : index
    %c0_14 = arith.constant 0 : index
    %49 = vector.load %arg6[%c0_13, %c0_14] : memref<640x128xbf16, #tpu.memory_space<vmem>>, vector<640x128xbf16>
    %cst_15 = arith.constant dense<0.000000e+00> : vector<8x128xf32>
    %50 = tpu.matmul %48, %49, %cst_15 {dimension_numbers = #tpu.dot_dimension_numbers<[1], [0], [0], [1], [0, 0, 1, 1], [], []>} : vector<8x640xbf16>, vector<640x128xbf16>, vector<8x128xf32> -> vector<8x128xf32>
    %c0_16 = arith.constant 0 : index
    %c0_17 = arith.constant 0 : index
    %51 = vector.load %arg7[%c0_16, %c0_17] : memref<1x128xf32, #tpu.memory_space<vmem>>, vector<1x128xf32>
    %52 = vector.broadcast %51 : vector<1x128xf32> to vector<8x128xf32>
    %53 = arith.addf %50, %52 : vector<8x128xf32>
    %cst_18 = arith.constant 0.000000e+00 : f32
    %54 = vector.broadcast %cst_18 : f32 to vector<8x128xf32>
    %55 = arith.maximumf %53, %54 : vector<8x128xf32>
    %c0_19 = arith.constant 0 : index
    %c0_20 = arith.constant 0 : index
    %56 = vector.load %arg8[%c0_19, %c0_20] : memref<128x128xf32, #tpu.memory_space<vmem>>, vector<128x128xf32>
    %cst_21 = arith.constant dense<0.000000e+00> : vector<8x128xf32>
    %57 = tpu.matmul %55, %56, %cst_21 {dimension_numbers = #tpu.dot_dimension_numbers<[1], [0], [0], [1], [0, 0, 1, 1], [], []>} : vector<8x128xf32>, vector<128x128xf32>, vector<8x128xf32> -> vector<8x128xf32>
    %c0_22 = arith.constant 0 : index
    %c0_23 = arith.constant 0 : index
    %58 = vector.load %arg9[%c0_22, %c0_23] : memref<1x128xf32, #tpu.memory_space<vmem>>, vector<1x128xf32>
    %59 = vector.broadcast %58 : vector<1x128xf32> to vector<8x128xf32>
    %60 = arith.addf %57, %59 : vector<8x128xf32>
    %cst_24 = arith.constant 0.000000e+00 : f32
    %61 = vector.broadcast %cst_24 : f32 to vector<8x128xf32>
    %62 = arith.maximumf %60, %61 : vector<8x128xf32>
    %c0_25 = arith.constant 0 : index
    %c0_26 = arith.constant 0 : index
    %63 = vector.load %arg10[%c0_25, %c0_26] : memref<128x128xf32, #tpu.memory_space<vmem>>, vector<128x128xf32>
    %cst_27 = arith.constant dense<0.000000e+00> : vector<8x128xf32>
    %64 = tpu.matmul %62, %63, %cst_27 {dimension_numbers = #tpu.dot_dimension_numbers<[1], [0], [0], [1], [0, 0, 1, 1], [], []>} : vector<8x128xf32>, vector<128x128xf32>, vector<8x128xf32> -> vector<8x128xf32>
    %c0_28 = arith.constant 0 : index
    %c0_29 = arith.constant 0 : index
    %65 = vector.load %arg11[%c0_28, %c0_29] : memref<1x128xf32, #tpu.memory_space<vmem>>, vector<1x128xf32>
    %66 = vector.broadcast %65 : vector<1x128xf32> to vector<8x128xf32>
    %67 = arith.addf %64, %66 : vector<8x128xf32>
    %c0_30 = arith.constant 0 : index
    %c0_31 = arith.constant 0 : index
    %68 = vector.load %arg12[%c0_30, %c0_31] : memref<8x128xf32, #tpu.memory_space<vmem>>, vector<8x128xf32>
    tpu.vector_store %arg12[%c0_30, %c0_31], %67 {strides = array<i32>} : memref<8x128xf32, #tpu.memory_space<vmem>>, vector<8x128xf32>,
    return
  }
  func.func @transform_0(%arg0: i32) -> (i32, i32, i32) {
    %c0_i32 = arith.constant 0 : i32
    %c0_i32_0 = arith.constant 0 : i32
    %c0_i32_1 = arith.constant 0 : i32
    return %arg0, %c0_i32, %c0_i32_0 : i32, i32, i32
  }
  func.func @transform_1(%arg0: i32) -> (i32, i32) {
    %c0_i32 = arith.constant 0 : i32
    %c0_i32_0 = arith.constant 0 : i32
    %c0_i32_1 = arith.constant 0 : i32
    return %c0_i32, %c0_i32_0 : i32, i32
  }
  func.func @transform_2(%arg0: i32) -> (i32, i32) {
    %c0_i32 = arith.constant 0 : i32
    %c0_i32_0 = arith.constant 0 : i32
    %c0_i32_1 = arith.constant 0 : i32
    return %c0_i32, %c0_i32_0 : i32, i32
  }
  func.func @transform_3(%arg0: i32) -> (i32, i32) {
    %c0_i32 = arith.constant 0 : i32
    %c0_i32_0 = arith.constant 0 : i32
    %c0_i32_1 = arith.constant 0 : i32
    return %c0_i32, %c0_i32_0 : i32, i32
  }
  func.func @transform_4(%arg0: i32) -> (i32, i32) {
    %c0_i32 = arith.constant 0 : i32
    %c0_i32_0 = arith.constant 0 : i32
    %c0_i32_1 = arith.constant 0 : i32
    return %c0_i32, %c0_i32_0 : i32, i32
  }
  func.func @transform_5(%arg0: i32) -> (i32, i32) {
    %c0_i32 = arith.constant 0 : i32
    %c0_i32_0 = arith.constant 0 : i32
    %c0_i32_1 = arith.constant 0 : i32
    return %c0_i32, %c0_i32_0 : i32, i32
  }
  func.func @transform_6(%arg0: i32) -> (i32, i32) {
    %c0_i32 = arith.constant 0 : i32
    %c0_i32_0 = arith.constant 0 : i32
    %c0_i32_1 = arith.constant 0 : i32
    return %c0_i32, %c0_i32_0 : i32, i32
  }
  func.func @transform_7(%arg0: i32) -> (i32, i32) {
    %c0_i32 = arith.constant 0 : i32
    %c0_i32_0 = arith.constant 0 : i32
    %c0_i32_1 = arith.constant 0 : i32
    return %c0_i32, %c0_i32_0 : i32, i32
  }
  func.func @transform_8(%arg0: i32) -> (i32, i32) {
    %c0_i32 = arith.constant 0 : i32
    %c0_i32_0 = arith.constant 0 : i32
    %c0_i32_1 = arith.constant 0 : i32
    return %c0_i32, %c0_i32_0 : i32, i32
  }
  func.func @transform_9(%arg0: i32) -> (i32, i32) {
    %c0_i32 = arith.constant 0 : i32
    %c0_i32_0 = arith.constant 0 : i32
    %c0_i32_1 = arith.constant 0 : i32
    return %c0_i32, %c0_i32_0 : i32, i32
  }
  func.func @transform_10(%arg0: i32) -> (i32, i32) {
    %c0_i32 = arith.constant 0 : i32
    %c0_i32_0 = arith.constant 0 : i32
    %c0_i32_1 = arith.constant 0 : i32
    return %c0_i32, %c0_i32_0 : i32, i32
  }
  func.func @transform_11(%arg0: i32) -> (i32, i32) {
    %c0_i32 = arith.constant 0 : i32
    %c0_i32_0 = arith.constant 0 : i32
    return %arg0, %c0_i32 : i32, i32
  }
}

</mosaic_0001>

<llo_original>
// kernel: lenet_forward.1
$region0: #{lenet_forward.1}
  #allocation0 [shape = 'u32[]', space=smem, size = 0x4, offset = 0x4, fixed_abs, tag = 'smem constant byte address 0x4 - core index']
  #allocation1 [shape = 'u32[144,128]{1,0:T(1,128)}', space=vmem, size = 0x12000, scoped, tag = 'internal scratch']
  %s0 = inlined_call_operand.vmem [shape: bf16[1,224,512], index: 0, kind: input, shape index: {}]
  %s1 = inlined_call_operand.vmem [shape: bf16[512,256], index: 1, kind: input, shape index: {}]
  %s2 = inlined_call_operand.vmem [shape: f32[1,256], index: 2, kind: input, shape index: {}]
  %s3 = inlined_call_operand.vmem [shape: bf16[640,256], index: 3, kind: input, shape index: {}]
  %s4 = inlined_call_operand.vmem [shape: f32[1,256], index: 4, kind: input, shape index: {}]
  %s5 = inlined_call_operand.vmem [shape: bf16[640,128], index: 5, kind: input, shape index: {}]
  %s6 = inlined_call_operand.vmem [shape: f32[1,128], index: 6, kind: input, shape index: {}]
  %s7 = inlined_call_operand.vmem [shape: f32[128,128], index: 7, kind: input, shape index: {}]
  %s8 = inlined_call_operand.vmem [shape: f32[1,128], index: 8, kind: input, shape index: {}]
  %s9 = inlined_call_operand.vmem [shape: f32[128,128], index: 9, kind: input, shape index: {}]
  %s10 = inlined_call_operand.vmem [shape: f32[1,128], index: 10, kind: input, shape index: {}]
  %s11 = inlined_call_operand.vmem [shape: f32[8,128], index: 11, kind: output, shape index: {}]
  %s12 = sld [smem:[#allocation0]]
  $region54: #{lenet_forward.1} parent=0
    _
  %s14 = ssub.s32 1, %s12
  %s15 = scalar_select 0, %s14, %s12
  // Predicated region
  $region2: #{lenet_forward.1} parent=0 // pred_check
    _
  $region3: #{lenet_forward.1} parent=0 // pred_check_branch
    %17 = sbr.rel (0) target = $region5
  $region4: #{lenet_forward.1} parent=0 // pred_region
    _
  $region5: #{lenet_forward.1} parent=0 // pred_fallthru
    _
  // Predicated region
  $region6: #{lenet_forward.1} parent=0 // pred_check
    _
  $region7: #{lenet_forward.1} parent=0 // pred_check_branch
    %19 = sbr.rel (0) target = $region9
  $region8: #{lenet_forward.1} parent=0 // pred_region
    _
  $region9: #{lenet_forward.1} parent=0 // pred_fallthru
    _
  // Predicated region
  $region10: #{lenet_forward.1} parent=0 // pred_check
    _
  $region11: #{lenet_forward.1} parent=0 // pred_check_branch
    %21 = sbr.rel (0) target = $region13
  $region12: #{lenet_forward.1} parent=0 // pred_region
    _
  $region13: #{lenet_forward.1} parent=0 // pred_fallthru
    _
  // Predicated region
  $region14: #{lenet_forward.1} parent=0 // pred_check
    _
  $region15: #{lenet_forward.1} parent=0 // pred_check_branch
    %23 = sbr.rel (0) target = $region17
  $region16: #{lenet_forward.1} parent=0 // pred_region
    _
  $region17: #{lenet_forward.1} parent=0 // pred_fallthru
    _
  // Predicated region
  $region18: #{lenet_forward.1} parent=0 // pred_check
    _
  $region19: #{lenet_forward.1} parent=0 // pred_check_branch
    %25 = sbr.rel (0) target = $region21
  $region20: #{lenet_forward.1} parent=0 // pred_region
    _
  $region21: #{lenet_forward.1} parent=0 // pred_fallthru
    _
  // Predicated region
  $region22: #{lenet_forward.1} parent=0 // pred_check
    _
  $region23: #{lenet_forward.1} parent=0 // pred_check_branch
    %27 = sbr.rel (0) target = $region25
  $region24: #{lenet_forward.1} parent=0 // pred_region
    _
  $region25: #{lenet_forward.1} parent=0 // pred_fallthru
    _
  // Predicated region
  $region26: #{lenet_forward.1} parent=0 // pred_check
    _
  $region27: #{lenet_forward.1} parent=0 // pred_check_branch
    %29 = sbr.rel (0) target = $region29
  $region28: #{lenet_forward.1} parent=0 // pred_region
    _
  $region29: #{lenet_forward.1} parent=0 // pred_fallthru
    _
  // Predicated region
  $region30: #{lenet_forward.1} parent=0 // pred_check
    _
  $region31: #{lenet_forward.1} parent=0 // pred_check_branch
    %31 = sbr.rel (0) target = $region33
  $region32: #{lenet_forward.1} parent=0 // pred_region
    _
  $region33: #{lenet_forward.1} parent=0 // pred_fallthru
    _
  // Predicated region
  $region34: #{lenet_forward.1} parent=0 // pred_check
    _
  $region35: #{lenet_forward.1} parent=0 // pred_check_branch
    %33 = sbr.rel (0) target = $region37
  $region36: #{lenet_forward.1} parent=0 // pred_region
    _
  $region37: #{lenet_forward.1} parent=0 // pred_fallthru
    _
  // Predicated region
  $region38: #{lenet_forward.1} parent=0 // pred_check
    _
  $region39: #{lenet_forward.1} parent=0 // pred_check_branch
    %35 = sbr.rel (0) target = $region41
  $region40: #{lenet_forward.1} parent=0 // pred_region
    _
  $region41: #{lenet_forward.1} parent=0 // pred_fallthru
    _
  // Predicated region
  $region42: #{lenet_forward.1} parent=0 // pred_check
    _
  $region43: #{lenet_forward.1} parent=0 // pred_check_branch
    %37 = sbr.rel (0) target = $region45
  $region44: #{lenet_forward.1} parent=0 // pred_region
    _
  $region45: #{lenet_forward.1} parent=0 // pred_fallthru
    _
  %v39 = vld [vmem:[%s0] sm:$0xff]
  %v40 = vld [vmem:[%s0 + $0x8] sm:$0xff]
  %v41 = vld [vmem:[%s0 + $0x10] sm:$0xff]
  %v42 = vld [vmem:[%s0 + $0x18] sm:$0xff]
  %v43 = vld [vmem:[%s0 + $0x20] sm:$0xff]
  %v44 = vld [vmem:[%s0 + $0x28] sm:$0xff]
  %v45 = vld [vmem:[%s0 + $0x30] sm:$0xff]
  %v46 = vld [vmem:[%s0 + $0x38] sm:$0xff]
  %v47 = vld [vmem:[%s0 + $0x40] sm:$0xff]
  %v48 = vld [vmem:[%s0 + $0x48] sm:$0xff]
  %v49 = vld [vmem:[%s0 + $0x50] sm:$0xff]
  %v50 = vld [vmem:[%s0 + $0x58] sm:$0xff]
  %v51 = vld [vmem:[%s0 + $0x60] sm:$0xff]
  %v52 = vld [vmem:[%s0 + $0x68] sm:$0xff]
  %v53 = vld [vmem:[%s0 + $0x70] sm:$0xff]
  %v54 = vld [vmem:[%s0 + $0x78] sm:$0xff]
  %v55 = vld [vmem:[%s0 + $0x80] sm:$0xff]
  %v56 = vld [vmem:[%s0 + $0x88] sm:$0xff]
  %v57 = vld [vmem:[%s0 + $0x90] sm:$0xff]
  %v58 = vld [vmem:[%s0 + $0x98] sm:$0xff]
  %v59 = vld [vmem:[%s0 + $0xa0] sm:$0xff]
  %v60 = vld [vmem:[%s0 + $0xa8] sm:$0xff]
  %v61 = vld [vmem:[%s0 + $0xb0] sm:$0xff]
  %v62 = vld [vmem:[%s0 + $0xb8] sm:$0xff]
  %v63 = vld [vmem:[%s0 + $0xc0] sm:$0xff]
  %v64 = vld [vmem:[%s0 + $0xc8] sm:$0xff]
  %v65 = vld [vmem:[%s0 + $0xd0] sm:$0xff]
  %v66 = vld [vmem:[%s0 + $0xd8] sm:$0xff]
  %v67 = vld [vmem:[%s0 + $0xe0] sm:$0xff]
  %v68 = vld [vmem:[%s0 + $0xe8] sm:$0xff]
  %v69 = vld [vmem:[%s0 + $0xf0] sm:$0xff]
  %v70 = vld [vmem:[%s0 + $0xf8] sm:$0xff]
  %v71 = vld [vmem:[%s0 + $0x100] sm:$0xff]
  %v72 = vld [vmem:[%s0 + $0x108] sm:$0xff]
  %v73 = vld [vmem:[%s0 + $0x110] sm:$0xff]
  %v74 = vld [vmem:[%s0 + $0x118] sm:$0xff]
  %v75 = vld [vmem:[%s0 + $0x120] sm:$0xff]
  %v76 = vld [vmem:[%s0 + $0x128] sm:$0xff]
  %v77 = vld [vmem:[%s0 + $0x130] sm:$0xff]
  %v78 = vld [vmem:[%s0 + $0x138] sm:$0xff]
  %v79 = vld [vmem:[%s0 + $0x140] sm:$0xff]
  %v80 = vld [vmem:[%s0 + $0x148] sm:$0xff]
  %v81 = vld [vmem:[%s0 + $0x150] sm:$0xff]
  %v82 = vld [vmem:[%s0 + $0x158] sm:$0xff]
  %v83 = vld [vmem:[%s0 + $0x160] sm:$0xff]
  %v84 = vld [vmem:[%s0 + $0x168] sm:$0xff]
  %v85 = vld [vmem:[%s0 + $0x170] sm:$0xff]
  %v86 = vld [vmem:[%s0 + $0x178] sm:$0xff]
  %v87 = vld [vmem:[%s0 + $0x180] sm:$0xff]
  %v88 = vld [vmem:[%s0 + $0x188] sm:$0xff]
  %v89 = vld [vmem:[%s0 + $0x190] sm:$0xff]
  %v90 = vld [vmem:[%s0 + $0x198] sm:$0xff]
  %v91 = vld [vmem:[%s0 + $0x1a0] sm:$0xff]
  %v92 = vld [vmem:[%s0 + $0x1a8] sm:$0xff]
  %v93 = vld [vmem:[%s0 + $0x1b0] sm:$0xff]
  %v94 = vld [vmem:[%s0 + $0x1b8] sm:$0xff]
  %v95 = vld [vmem:[%s1] sm:$0xff]
  %v96 = vld [vmem:[%s1 + $0x8] sm:$0xff]
  %v97 = vld [vmem:[%s1 + $0x10] sm:$0xff]
  %v98 = vld [vmem:[%s1 + $0x18] sm:$0xff]
  %v99 = vld [vmem:[%s1 + $0x20] sm:$0xff]
  %v100 = vld [vmem:[%s1 + $0x28] sm:$0xff]
  %v101 = vld [vmem:[%s1 + $0x30] sm:$0xff]
  %v102 = vld [vmem:[%s1 + $0x38] sm:$0xff]
  %v103 = vld [vmem:[%s1 + $0x40] sm:$0xff]
  %v104 = vld [vmem:[%s1 + $0x48] sm:$0xff]
  %v105 = vld [vmem:[%s1 + $0x50] sm:$0xff]
  %v106 = vld [vmem:[%s1 + $0x58] sm:$0xff]
  %v107 = vld [vmem:[%s1 + $0x60] sm:$0xff]
  %v108 = vld [vmem:[%s1 + $0x68] sm:$0xff]
  %v109 = vld [vmem:[%s1 + $0x70] sm:$0xff]
  %v110 = vld [vmem:[%s1 + $0x78] sm:$0xff]
  %v111 = vld [vmem:[%s1 + $0x80] sm:$0xff]
  %v112 = vld [vmem:[%s1 + $0x88] sm:$0xff]
  %v113 = vld [vmem:[%s1 + $0x90] sm:$0xff]
  %v114 = vld [vmem:[%s1 + $0x98] sm:$0xff]
  %v115 = vld [vmem:[%s1 + $0xa0] sm:$0xff]
  %v116 = vld [vmem:[%s1 + $0xa8] sm:$0xff]
  %v117 = vld [vmem:[%s1 + $0xb0] sm:$0xff]
  %v118 = vld [vmem:[%s1 + $0xb8] sm:$0xff]
  %v119 = vld [vmem:[%s1 + $0xc0] sm:$0xff]
  %v120 = vld [vmem:[%s1 + $0xc8] sm:$0xff]
  %v121 = vld [vmem:[%s1 + $0xd0] sm:$0xff]
  %v122 = vld [vmem:[%s1 + $0xd8] sm:$0xff]
  %v123 = vld [vmem:[%s1 + $0xe0] sm:$0xff]
  %v124 = vld [vmem:[%s1 + $0xe8] sm:$0xff]
  %v125 = vld [vmem:[%s1 + $0xf0] sm:$0xff]
  %v126 = vld [vmem:[%s1 + $0xf8] sm:$0xff]
  %v127 = vld [vmem:[%s1 + $0x100] sm:$0xff]
  %v128 = vld [vmem:[%s1 + $0x108] sm:$0xff]
  %v129 = vld [vmem:[%s1 + $0x110] sm:$0xff]
  %v130 = vld [vmem:[%s1 + $0x118] sm:$0xff]
  %v131 = vld [vmem:[%s1 + $0x120] sm:$0xff]
  %v132 = vld [vmem:[%s1 + $0x128] sm:$0xff]
  %v133 = vld [vmem:[%s1 + $0x130] sm:$0xff]
  %v134 = vld [vmem:[%s1 + $0x138] sm:$0xff]
  %v135 = vld [vmem:[%s1 + $0x140] sm:$0xff]
  %v136 = vld [vmem:[%s1 + $0x148] sm:$0xff]
  %v137 = vld [vmem:[%s1 + $0x150] sm:$0xff]
  %v138 = vld [vmem:[%s1 + $0x158] sm:$0xff]
  %v139 = vld [vmem:[%s1 + $0x160] sm:$0xff]
  %v140 = vld [vmem:[%s1 + $0x168] sm:$0xff]
  %v141 = vld [vmem:[%s1 + $0x170] sm:$0xff]
  %v142 = vld [vmem:[%s1 + $0x178] sm:$0xff]
  %v143 = vld [vmem:[%s1 + $0x180] sm:$0xff]
  %v144 = vld [vmem:[%s1 + $0x188] sm:$0xff]
  %v145 = vld [vmem:[%s1 + $0x190] sm:$0xff]
  %v146 = vld [vmem:[%s1 + $0x198] sm:$0xff]
  %v147 = vld [vmem:[%s1 + $0x1a0] sm:$0xff]
  %v148 = vld [vmem:[%s1 + $0x1a8] sm:$0xff]
  %v149 = vld [vmem:[%s1 + $0x1b0] sm:$0xff]
  %v150 = vld [vmem:[%s1 + $0x1b8] sm:$0xff]
  %v151 = vld [vmem:[%s1 + $0x1c0] sm:$0xff]
  %v152 = vld [vmem:[%s1 + $0x1c8] sm:$0xff]
  %v153 = vld [vmem:[%s1 + $0x1d0] sm:$0xff]
  %v154 = vld [vmem:[%s1 + $0x1d8] sm:$0xff]
  %v155 = vld [vmem:[%s1 + $0x1e0] sm:$0xff]
  %v156 = vld [vmem:[%s1 + $0x1e8] sm:$0xff]
  %v157 = vld [vmem:[%s1 + $0x1f0] sm:$0xff]
  %v158 = vld [vmem:[%s1 + $0x1f8] sm:$0xff]
  %v215 = vunpack.c.l.b16 %v39
  %v216 = vunpack.c.h.b16 %v39
  %v217 = vunpack.c.l.b16 %v40
  %v218 = vunpack.c.h.b16 %v40
  %v219 = vunpack.c.l.b16 %v41
  %v220 = vunpack.c.h.b16 %v41
  %v221 = vunpack.c.l.b16 %v42
  %v222 = vunpack.c.h.b16 %v42
  %v223 = vunpack.c.l.b16 %v43
  %v224 = vunpack.c.h.b16 %v43
  %v225 = vunpack.c.l.b16 %v44
  %v226 = vunpack.c.h.b16 %v44
  %v227 = vunpack.c.l.b16 %v45
  %v228 = vunpack.c.h.b16 %v45
  %v229 = vunpack.c.l.b16 %v46
  %v230 = vunpack.c.h.b16 %v46
  %v231 = vunpack.c.l.b16 %v47
  %v232 = vunpack.c.h.b16 %v47
  %v233 = vunpack.c.l.b16 %v48
  %v234 = vunpack.c.h.b16 %v48
  %v235 = vunpack.c.l.b16 %v49
  %v236 = vunpack.c.h.b16 %v49
  %v237 = vunpack.c.l.b16 %v50
  %v238 = vunpack.c.h.b16 %v50
  %v239 = vunpack.c.l.b16 %v51
  %v240 = vunpack.c.h.b16 %v51
  %v241 = vunpack.c.l.b16 %v52
  %v242 = vunpack.c.h.b16 %v52
  %v243 = vunpack.c.l.b16 %v53
  %v244 = vunpack.c.h.b16 %v53
  %v245 = vunpack.c.l.b16 %v54
  %v246 = vunpack.c.h.b16 %v54
  %v247 = vunpack.c.l.b16 %v55
  %v248 = vunpack.c.h.b16 %v55
  %v249 = vunpack.c.l.b16 %v56
  %v250 = vunpack.c.h.b16 %v56
  %v251 = vunpack.c.l.b16 %v57
  %v252 = vunpack.c.h.b16 %v57
  %v253 = vunpack.c.l.b16 %v58
  %v254 = vunpack.c.h.b16 %v58
  %v255 = vunpack.c.l.b16 %v59
  %v256 = vunpack.c.h.b16 %v59
  %v257 = vunpack.c.l.b16 %v60
  %v258 = vunpack.c.h.b16 %v60
  %v259 = vunpack.c.l.b16 %v61
  %v260 = vunpack.c.h.b16 %v61
  %v261 = vunpack.c.l.b16 %v62
  %v262 = vunpack.c.h.b16 %v62
  %v263 = vunpack.c.l.b16 %v63
  %v264 = vunpack.c.h.b16 %v63
  %v265 = vunpack.c.l.b16 %v64
  %v266 = vunpack.c.h.b16 %v64
  %v267 = vunpack.c.l.b16 %v65
  %v268 = vunpack.c.h.b16 %v65
  %v269 = vunpack.c.l.b16 %v66
  %v270 = vunpack.c.h.b16 %v66
  %v271 = vunpack.c.l.b16 %v67
  %v272 = vunpack.c.h.b16 %v67
  %v273 = vunpack.c.l.b16 %v68
  %v274 = vunpack.c.h.b16 %v68
  %v275 = vunpack.c.l.b16 %v69
  %v276 = vunpack.c.h.b16 %v69
  %v277 = vunpack.c.l.b16 %v70
  %v278 = vunpack.c.h.b16 %v70
  %v279 = vunpack.c.l.b16 %v71
  %v280 = vunpack.c.h.b16 %v71
  %v281 = vunpack.c.l.b16 %v72
  %v282 = vunpack.c.h.b16 %v72
  %v283 = vunpack.c.l.b16 %v73
  %v284 = vunpack.c.h.b16 %v73
  %v285 = vunpack.c.l.b16 %v74
  %v286 = vunpack.c.h.b16 %v74
  %v287 = vunpack.c.l.b16 %v75
  %v288 = vunpack.c.h.b16 %v75
  %v289 = vunpack.c.l.b16 %v76
  %v290 = vunpack.c.h.b16 %v76
  %v291 = vunpack.c.l.b16 %v77
  %v292 = vunpack.c.h.b16 %v77
  %v293 = vunpack.c.l.b16 %v78
  %v294 = vunpack.c.h.b16 %v78
  %v295 = vunpack.c.l.b16 %v79
  %v296 = vunpack.c.h.b16 %v79
  %v297 = vunpack.c.l.b16 %v80
  %v298 = vunpack.c.h.b16 %v80
  %v299 = vunpack.c.l.b16 %v81
  %v300 = vunpack.c.h.b16 %v81
  %v301 = vunpack.c.l.b16 %v82
  %v302 = vunpack.c.h.b16 %v82
  %v303 = vunpack.c.l.b16 %v83
  %v304 = vunpack.c.h.b16 %v83
  %v305 = vunpack.c.l.b16 %v84
  %v306 = vunpack.c.h.b16 %v84
  %v307 = vunpack.c.l.b16 %v85
  %v308 = vunpack.c.h.b16 %v85
  %v309 = vunpack.c.l.b16 %v86
  %v310 = vunpack.c.h.b16 %v86
  %v311 = vunpack.c.l.b16 %v87
  %v312 = vunpack.c.h.b16 %v87
  %v313 = vunpack.c.l.b16 %v88
  %v314 = vunpack.c.h.b16 %v88
  %v315 = vunpack.c.l.b16 %v89
  %v316 = vunpack.c.h.b16 %v89
  %v317 = vunpack.c.l.b16 %v90
  %v318 = vunpack.c.h.b16 %v90
  %v319 = vunpack.c.l.b16 %v91
  %v320 = vunpack.c.h.b16 %v91
  %v321 = vunpack.c.l.b16 %v92
  %v322 = vunpack.c.h.b16 %v92
  %v323 = vunpack.c.l.b16 %v93
  %v324 = vunpack.c.h.b16 %v93
  %v325 = vunpack.c.l.b16 %v94
  %v326 = vunpack.c.h.b16 %v94
  %v327 = vpack.c.b16 %v219, %v215
  %v328 = vpack.c.b16 %v220, %v216
  %v329 = vpack.c.b16 %v221, %v217
  %v330 = vpack.c.b16 %v222, %v218
  %v331 = vpack.c.b16 %v227, %v223
  %v332 = vpack.c.b16 %v228, %v224
  %v333 = vpack.c.b16 %v229, %v225
  %v334 = vpack.c.b16 %v230, %v226
  %v335 = vpack.c.b16 %v235, %v231
  %v336 = vpack.c.b16 %v236, %v232
  %v337 = vpack.c.b16 %v237, %v233
  %v338 = vpack.c.b16 %v238, %v234
  %v339 = vpack.c.b16 %v243, %v239
  %v340 = vpack.c.b16 %v244, %v240
  %v341 = vpack.c.b16 %v245, %v241
  %v342 = vpack.c.b16 %v246, %v242
  %v343 = vpack.c.b16 %v251, %v247
  %v344 = vpack.c.b16 %v252, %v248
  %v345 = vpack.c.b16 %v253, %v249
  %v346 = vpack.c.b16 %v254, %v250
  %v347 = vpack.c.b16 %v259, %v255
  %v348 = vpack.c.b16 %v260, %v256
  %v349 = vpack.c.b16 %v261, %v257
  %v350 = vpack.c.b16 %v262, %v258
  %v351 = vpack.c.b16 %v267, %v263
  %v352 = vpack.c.b16 %v268, %v264
  %v353 = vpack.c.b16 %v269, %v265
  %v354 = vpack.c.b16 %v270, %v266
  %v355 = vpack.c.b16 %v275, %v271
  %v356 = vpack.c.b16 %v276, %v272
  %v357 = vpack.c.b16 %v277, %v273
  %v358 = vpack.c.b16 %v278, %v274
  %v359 = vpack.c.b16 %v283, %v279
  %v360 = vpack.c.b16 %v284, %v280
  %v361 = vpack.c.b16 %v285, %v281
  %v362 = vpack.c.b16 %v286, %v282
  %v363 = vpack.c.b16 %v291, %v287
  %v364 = vpack.c.b16 %v292, %v288
  %v365 = vpack.c.b16 %v293, %v289
  %v366 = vpack.c.b16 %v294, %v290
  %v367 = vpack.c.b16 %v299, %v295
  %v368 = vpack.c.b16 %v300, %v296
  %v369 = vpack.c.b16 %v301, %v297
  %v370 = vpack.c.b16 %v302, %v298
  %v371 = vpack.c.b16 %v307, %v303
  %v372 = vpack.c.b16 %v308, %v304
  %v373 = vpack.c.b16 %v309, %v305
  %v374 = vpack.c.b16 %v310, %v306
  %v375 = vpack.c.b16 %v315, %v311
  %v376 = vpack.c.b16 %v316, %v312
  %v377 = vpack.c.b16 %v317, %v313
  %v378 = vpack.c.b16 %v318, %v314
  %v379 = vpack.c.b16 %v323, %v319
  %v380 = vpack.c.b16 %v324, %v320
  %v381 = vpack.c.b16 %v325, %v321
  %v382 = vpack.c.b16 %v326, %v322
  %v503 = vunpack.c.l.b16 %v95
  %v504 = vunpack.c.h.b16 %v95
  %v505 = vunpack.c.l.b16 %v96
  %v506 = vunpack.c.h.b16 %v96
  %v507 = vunpack.c.l.b16 %v97
  %v508 = vunpack.c.h.b16 %v97
  %v509 = vunpack.c.l.b16 %v98
  %v510 = vunpack.c.h.b16 %v98
  %v511 = vunpack.c.l.b16 %v99
  %v512 = vunpack.c.h.b16 %v99
  %v513 = vunpack.c.l.b16 %v100
  %v514 = vunpack.c.h.b16 %v100
  %v515 = vunpack.c.l.b16 %v101
  %v516 = vunpack.c.h.b16 %v101
  %v517 = vunpack.c.l.b16 %v102
  %v518 = vunpack.c.h.b16 %v102
  %v519 = vunpack.c.l.b16 %v103
  %v520 = vunpack.c.h.b16 %v103
  %v521 = vunpack.c.l.b16 %v104
  %v522 = vunpack.c.h.b16 %v104
  %v523 = vunpack.c.l.b16 %v105
  %v524 = vunpack.c.h.b16 %v105
  %v525 = vunpack.c.l.b16 %v106
  %v526 = vunpack.c.h.b16 %v106
  %v527 = vunpack.c.l.b16 %v107
  %v528 = vunpack.c.h.b16 %v107
  %v529 = vunpack.c.l.b16 %v108
  %v530 = vunpack.c.h.b16 %v108
  %v531 = vunpack.c.l.b16 %v109
  %v532 = vunpack.c.h.b16 %v109
  %v533 = vunpack.c.l.b16 %v110
  %v534 = vunpack.c.h.b16 %v110
  %v535 = vunpack.c.l.b16 %v111
  %v536 = vunpack.c.h.b16 %v111
  %v537 = vunpack.c.l.b16 %v112
  %v538 = vunpack.c.h.b16 %v112
  %v539 = vunpack.c.l.b16 %v113
  %v540 = vunpack.c.h.b16 %v113
  %v541 = vunpack.c.l.b16 %v114
  %v542 = vunpack.c.h.b16 %v114
  %v543 = vunpack.c.l.b16 %v115
  %v544 = vunpack.c.h.b16 %v115
  %v545 = vunpack.c.l.b16 %v116
  %v546 = vunpack.c.h.b16 %v116
  %v547 = vunpack.c.l.b16 %v117
  %v548 = vunpack.c.h.b16 %v117
  %v549 = vunpack.c.l.b16 %v118
  %v550 = vunpack.c.h.b16 %v118
  %v551 = vunpack.c.l.b16 %v119
  %v552 = vunpack.c.h.b16 %v119
  %v553 = vunpack.c.l.b16 %v120
  %v554 = vunpack.c.h.b16 %v120
  %v555 = vunpack.c.l.b16 %v121
  %v556 = vunpack.c.h.b16 %v121
  %v557 = vunpack.c.l.b16 %v122
  %v558 = vunpack.c.h.b16 %v122
  %v559 = vunpack.c.l.b16 %v123
  %v560 = vunpack.c.h.b16 %v123
  %v561 = vunpack.c.l.b16 %v124
  %v562 = vunpack.c.h.b16 %v124
  %v563 = vunpack.c.l.b16 %v125
  %v564 = vunpack.c.h.b16 %v125
  %v565 = vunpack.c.l.b16 %v126
  %v566 = vunpack.c.h.b16 %v126
  %v567 = vunpack.c.l.b16 %v127
  %v568 = vunpack.c.h.b16 %v127
  %v569 = vunpack.c.l.b16 %v128
  %v570 = vunpack.c.h.b16 %v128
  %v571 = vunpack.c.l.b16 %v129
  %v572 = vunpack.c.h.b16 %v129
  %v573 = vunpack.c.l.b16 %v130
  %v574 = vunpack.c.h.b16 %v130
  %v575 = vunpack.c.l.b16 %v131
  %v576 = vunpack.c.h.b16 %v131
  %v577 = vunpack.c.l.b16 %v132
  %v578 = vunpack.c.h.b16 %v132
  %v579 = vunpack.c.l.b16 %v133
  %v580 = vunpack.c.h.b16 %v133
  %v581 = vunpack.c.l.b16 %v134
  %v582 = vunpack.c.h.b16 %v134
  %v583 = vunpack.c.l.b16 %v135
  %v584 = vunpack.c.h.b16 %v135
  %v585 = vunpack.c.l.b16 %v136
  %v586 = vunpack.c.h.b16 %v136
  %v587 = vunpack.c.l.b16 %v137
  %v588 = vunpack.c.h.b16 %v137
  %v589 = vunpack.c.l.b16 %v138
  %v590 = vunpack.c.h.b16 %v138
  %v591 = vunpack.c.l.b16 %v139
  %v592 = vunpack.c.h.b16 %v139
  %v593 = vunpack.c.l.b16 %v140
  %v594 = vunpack.c.h.b16 %v140
  %v595 = vunpack.c.l.b16 %v141
  %v596 = vunpack.c.h.b16 %v141
  %v597 = vunpack.c.l.b16 %v142
  %v598 = vunpack.c.h.b16 %v142
  %v599 = vunpack.c.l.b16 %v143
  %v600 = vunpack.c.h.b16 %v143
  %v601 = vunpack.c.l.b16 %v144
  %v602 = vunpack.c.h.b16 %v144
  %v603 = vunpack.c.l.b16 %v145
  %v604 = vunpack.c.h.b16 %v145
  %v605 = vunpack.c.l.b16 %v146
  %v606 = vunpack.c.h.b16 %v146
  %v607 = vunpack.c.l.b16 %v147
  %v608 = vunpack.c.h.b16 %v147
  %v609 = vunpack.c.l.b16 %v148
  %v610 = vunpack.c.h.b16 %v148
  %v611 = vunpack.c.l.b16 %v149
  %v612 = vunpack.c.h.b16 %v149
  %v613 = vunpack.c.l.b16 %v150
  %v614 = vunpack.c.h.b16 %v150
  %v615 = vunpack.c.l.b16 %v151
  %v616 = vunpack.c.h.b16 %v151
  %v617 = vunpack.c.l.b16 %v152
  %v618 = vunpack.c.h.b16 %v152
  %v619 = vunpack.c.l.b16 %v153
  %v620 = vunpack.c.h.b16 %v153
  %v621 = vunpack.c.l.b16 %v154
  %v622 = vunpack.c.h.b16 %v154
  %v623 = vunpack.c.l.b16 %v155
  %v624 = vunpack.c.h.b16 %v155
  %v625 = vunpack.c.l.b16 %v156
  %v626 = vunpack.c.h.b16 %v156
  %v627 = vunpack.c.l.b16 %v157
  %v628 = vunpack.c.h.b16 %v157
  %v629 = vunpack.c.l.b16 %v158
  %v630 = vunpack.c.h.b16 %v158
  %v631 = vpack.c.b16 %v505, %v503
  %v632 = vpack.c.b16 %v506, %v504
  %v633 = vpack.c.b16 %v509, %v507
  %v634 = vpack.c.b16 %v510, %v508
  %v635 = vpack.c.b16 %v513, %v511
  %v636 = vpack.c.b16 %v514, %v512
  %v637 = vpack.c.b16 %v517, %v515
  %v638 = vpack.c.b16 %v518, %v516
  %v639 = vpack.c.b16 %v521, %v519
  %v640 = vpack.c.b16 %v522, %v520
  %v641 = vpack.c.b16 %v525, %v523
  %v642 = vpack.c.b16 %v526, %v524
  %v643 = vpack.c.b16 %v529, %v527
  %v644 = vpack.c.b16 %v530, %v528
  %v645 = vpack.c.b16 %v533, %v531
  %v646 = vpack.c.b16 %v534, %v532
  %v647 = vpack.c.b16 %v537, %v535
  %v648 = vpack.c.b16 %v538, %v536
  %v649 = vpack.c.b16 %v541, %v539
  %v650 = vpack.c.b16 %v542, %v540
  %v651 = vpack.c.b16 %v545, %v543
  %v652 = vpack.c.b16 %v546, %v544
  %v653 = vpack.c.b16 %v549, %v547
  %v654 = vpack.c.b16 %v550, %v548
  %v655 = vpack.c.b16 %v553, %v551
  %v656 = vpack.c.b16 %v554, %v552
  %v657 = vpack.c.b16 %v557, %v555
  %v658 = vpack.c.b16 %v558, %v556
  %v659 = vpack.c.b16 %v561, %v559
  %v660 = vpack.c.b16 %v562, %v560
  %v661 = vpack.c.b16 %v565, %v563
  %v662 = vpack.c.b16 %v566, %v564
  %v663 = vpack.c.b16 %v569, %v567
  %v664 = vpack.c.b16 %v570, %v568
  %v665 = vpack.c.b16 %v573, %v571
  %v666 = vpack.c.b16 %v574, %v572
  %v667 = vpack.c.b16 %v577, %v575
  %v668 = vpack.c.b16 %v578, %v576
  %v669 = vpack.c.b16 %v581, %v579
  %v670 = vpack.c.b16 %v582, %v580
  %v671 = vpack.c.b16 %v585, %v583
  %v672 = vpack.c.b16 %v586, %v584
  %v673 = vpack.c.b16 %v589, %v587
  %v674 = vpack.c.b16 %v590, %v588
  %v675 = vpack.c.b16 %v593, %v591
  %v676 = vpack.c.b16 %v594, %v592
  %v677 = vpack.c.b16 %v597, %v595
  %v678 = vpack.c.b16 %v598, %v596
  %v679 = vpack.c.b16 %v601, %v599
  %v680 = vpack.c.b16 %v602, %v600
  %v681 = vpack.c.b16 %v605, %v603
  %v682 = vpack.c.b16 %v606, %v604
  %v683 = vpack.c.b16 %v609, %v607
  %v684 = vpack.c.b16 %v610, %v608
  %v685 = vpack.c.b16 %v613, %v611
  %v686 = vpack.c.b16 %v614, %v612
  %v687 = vpack.c.b16 %v617, %v615
  %v688 = vpack.c.b16 %v618, %v616
  %v689 = vpack.c.b16 %v621, %v619
  %v690 = vpack.c.b16 %v622, %v620
  %v691 = vpack.c.b16 %v625, %v623
  %v692 = vpack.c.b16 %v626, %v624
  %v693 = vpack.c.b16 %v629, %v627
  %v694 = vpack.c.b16 %v630, %v628
  %759 = vmatprep.subr.bf16.mxu0 %v646
  %760 = vmatpush1.bf16.msra.mxu0 %v645
  %761 = vmatprep.subr.bf16.mxu0 %v644
  %762 = vmatpush1.bf16.msra.mxu0 %v643
  %763 = vmatprep.subr.bf16.mxu0 %v642
  %764 = vmatpush1.bf16.msra.mxu0 %v641
  %765 = vmatprep.subr.bf16.mxu0 %v640
  %766 = vmatpush1.bf16.msra.mxu0 %v639
  %767 = vmatprep.subr.bf16.mxu0 %v638
  %768 = vmatpush1.bf16.msra.mxu0 %v637
  %769 = vmatprep.subr.bf16.mxu0 %v636
  %770 = vmatpush1.bf16.msra.mxu0 %v635
  %771 = vmatprep.subr.bf16.mxu0 %v634
  %772 = vmatpush1.bf16.msra.mxu0 %v633
  %773 = vmatprep.subr.bf16.mxu0 %v632
  %774 = vmatpush1.bf16.msra.mxu0 %v631
  %775 = vmatprep.subr.bf16.mxu0 %v662
  %776 = vmatpush2.bf16.msra.mxu0 %v661
  %777 = vmatprep.subr.bf16.mxu0 %v660
  %778 = vmatpush2.bf16.msra.mxu0 %v659
  %779 = vmatprep.subr.bf16.mxu0 %v658
  %780 = vmatpush2.bf16.msra.mxu0 %v657
  %781 = vmatprep.subr.bf16.mxu0 %v656
  %782 = vmatpush2.bf16.msra.mxu0 %v655
  %783 = vmatprep.subr.bf16.mxu0 %v654
  %784 = vmatpush2.bf16.msra.mxu0 %v653
  %785 = vmatprep.subr.bf16.mxu0 %v652
  %786 = vmatpush2.bf16.msra.mxu0 %v651
  %787 = vmatprep.subr.bf16.mxu0 %v650
  %788 = vmatpush2.bf16.msra.mxu0 %v649
  %789 = vmatprep.subr.bf16.mxu0 %v648
  %790 = vmatpush2.bf16.msra.mxu0 %v647
  %791 = vmatprep.mubr.bf16.mxu0 %v328
  %792 = vmatmul.mubr.bf16.gmra.mxu0 %v327
  %v793 = vpop.f32.mrf.mxu0
  %v794 = vadd.f32 0.0, %v793
  %v795 = vpop.f32.mrf.mxu0
  %v796 = vadd.f32 0.0, %v795
  %v797 = vpop.f32.mrf.mxu0
  %v798 = vadd.f32 0.0, %v797
  %v799 = vpop.f32.mrf.mxu0
  %v800 = vadd.f32 0.0, %v799
  %801 = vmatprep.mubr.bf16.mxu0 %v332
  %802 = vmatmul.mubr.bf16.gmra.mxu0 %v331
  %v803 = vpop.f32.mrf.mxu0
  %v804 = vadd.f32 0.0, %v803
  %v805 = vpop.f32.mrf.mxu0
  %v806 = vadd.f32 0.0, %v805
  %v807 = vpop.f32.mrf.mxu0
  %v808 = vadd.f32 0.0, %v807
  %v809 = vpop.f32.mrf.mxu0
  %v810 = vadd.f32 0.0, %v809
  %811 = vmatprep.mubr.bf16.mxu0 %v336
  %812 = vmatmul.mubr.bf16.gmra.mxu0 %v335
  %v813 = vpop.f32.mrf.mxu0
  %v814 = vadd.f32 0.0, %v813
  %v815 = vpop.f32.mrf.mxu0
  %v816 = vadd.f32 0.0, %v815
  %v817 = vpop.f32.mrf.mxu0
  %v818 = vadd.f32 0.0, %v817
  %v819 = vpop.f32.mrf.mxu0
  %v820 = vadd.f32 0.0, %v819
  %821 = vmatprep.mubr.bf16.mxu0 %v340
  %822 = vmatmul.mubr.bf16.gmra.mxu0 %v339
  %v823 = vpop.f32.mrf.mxu0
  %v824 = vadd.f32 0.0, %v823
  %v825 = vpop.f32.mrf.mxu0
  %v826 = vadd.f32 0.0, %v825
  %v827 = vpop.f32.mrf.mxu0
  %v828 = vadd.f32 0.0, %v827
  %v829 = vpop.f32.mrf.mxu0
  %v830 = vadd.f32 0.0, %v829
  %831 = vmatprep.mubr.bf16.mxu0 %v344
  %832 = vmatmul.mubr.bf16.gmra.mxu0 %v343
  %v833 = vpop.f32.mrf.mxu0
  %v834 = vadd.f32 0.0, %v833
  %v835 = vpop.f32.mrf.mxu0
  %v836 = vadd.f32 0.0, %v835
  %v837 = vpop.f32.mrf.mxu0
  %v838 = vadd.f32 0.0, %v837
  %v839 = vpop.f32.mrf.mxu0
  %v840 = vadd.f32 0.0, %v839
  %841 = vmatprep.mubr.bf16.mxu0 %v348
  %842 = vmatmul.mubr.bf16.gmra.mxu0 %v347
  %v843 = vpop.f32.mrf.mxu0
  %v844 = vadd.f32 0.0, %v843
  %v845 = vpop.f32.mrf.mxu0
  %v846 = vadd.f32 0.0, %v845
  %v847 = vpop.f32.mrf.mxu0
  %v848 = vadd.f32 0.0, %v847
  %v849 = vpop.f32.mrf.mxu0
  %v850 = vadd.f32 0.0, %v849
  %851 = vmatprep.mubr.bf16.mxu0 %v352
  %852 = vmatmul.mubr.bf16.gmra.mxu0 %v351
  %v853 = vpop.f32.mrf.mxu0
  %v854 = vadd.f32 0.0, %v853
  %v855 = vpop.f32.mrf.mxu0
  %v856 = vadd.f32 0.0, %v855
  %v857 = vpop.f32.mrf.mxu0
  %v858 = vadd.f32 0.0, %v857
  %v859 = vpop.f32.mrf.mxu0
  %v860 = vadd.f32 0.0, %v859
  %861 = vmatprep.mubr.bf16.mxu0 %v356
  %862 = vmatmul.mubr.bf16.gmra.mxu0 %v355
  %v863 = vpop.f32.mrf.mxu0
  %v864 = vadd.f32 0.0, %v863
  %v865 = vpop.f32.mrf.mxu0
  %v866 = vadd.f32 0.0, %v865
  %v867 = vpop.f32.mrf.mxu0
  %v868 = vadd.f32 0.0, %v867
  %v869 = vpop.f32.mrf.mxu0
  %v870 = vadd.f32 0.0, %v869
  %871 = vmatprep.mubr.bf16.mxu0 %v360
  %872 = vmatmul.mubr.bf16.gmra.mxu0 %v359
  %v873 = vpop.f32.mrf.mxu0
  %v874 = vadd.f32 0.0, %v873
  %v875 = vpop.f32.mrf.mxu0
  %v876 = vadd.f32 0.0, %v875
  %v877 = vpop.f32.mrf.mxu0
  %v878 = vadd.f32 0.0, %v877
  %v879 = vpop.f32.mrf.mxu0
  %v880 = vadd.f32 0.0, %v879
  %881 = vmatprep.mubr.bf16.mxu0 %v364
  %882 = vmatmul.mubr.bf16.gmra.mxu0 %v363
  %v883 = vpop.f32.mrf.mxu0
  %v884 = vadd.f32 0.0, %v883
  %v885 = vpop.f32.mrf.mxu0
  %v886 = vadd.f32 0.0, %v885
  %v887 = vpop.f32.mrf.mxu0
  %v888 = vadd.f32 0.0, %v887
  %v889 = vpop.f32.mrf.mxu0
  %v890 = vadd.f32 0.0, %v889
  %891 = vmatprep.mubr.bf16.mxu0 %v368
  %892 = vmatmul.mubr.bf16.gmra.mxu0 %v367
  %v893 = vpop.f32.mrf.mxu0
  %v894 = vadd.f32 0.0, %v893
  %v895 = vpop.f32.mrf.mxu0
  %v896 = vadd.f32 0.0, %v895
  %v897 = vpop.f32.mrf.mxu0
  %v898 = vadd.f32 0.0, %v897
  %v899 = vpop.f32.mrf.mxu0
  %v900 = vadd.f32 0.0, %v899
  %901 = vmatprep.mubr.bf16.mxu0 %v372
  %902 = vmatmul.mubr.bf16.gmra.mxu0 %v371
  %v903 = vpop.f32.mrf.mxu0
  %v904 = vadd.f32 0.0, %v903
  %v905 = vpop.f32.mrf.mxu0
  %v906 = vadd.f32 0.0, %v905
  %v907 = vpop.f32.mrf.mxu0
  %v908 = vadd.f32 0.0, %v907
  %v909 = vpop.f32.mrf.mxu0
  %v910 = vadd.f32 0.0, %v909
  %911 = vmatprep.mubr.bf16.mxu0 %v376
  %912 = vmatmul.mubr.bf16.gmra.mxu0 %v375
  %v913 = vpop.f32.mrf.mxu0
  %v914 = vadd.f32 0.0, %v913
  %v915 = vpop.f32.mrf.mxu0
  %v916 = vadd.f32 0.0, %v915
  %v917 = vpop.f32.mrf.mxu0
  %v918 = vadd.f32 0.0, %v917
  %v919 = vpop.f32.mrf.mxu0
  %v920 = vadd.f32 0.0, %v919
  %921 = vmatprep.mubr.bf16.mxu0 %v380
  %922 = vmatmul.mubr.bf16.gmra.mxu0 %v379
  %v923 = vpop.f32.mrf.mxu0
  %v924 = vadd.f32 0.0, %v923
  %v925 = vpop.f32.mrf.mxu0
  %v926 = vadd.f32 0.0, %v925
  %v927 = vpop.f32.mrf.mxu0
  %v928 = vadd.f32 0.0, %v927
  %v929 = vpop.f32.mrf.mxu0
  %v930 = vadd.f32 0.0, %v929
  %931 = vdwg.mxu0
  %932 = vmatprep.subr.bf16.mxu0 %v678
  %933 = vmatpush1.bf16.msra.mxu0 %v677
  %934 = vmatprep.subr.bf16.mxu0 %v676
  %935 = vmatpush1.bf16.msra.mxu0 %v675
  %936 = vmatprep.subr.bf16.mxu0 %v674
  %937 = vmatpush1.bf16.msra.mxu0 %v673
  %938 = vmatprep.subr.bf16.mxu0 %v672
  %939 = vmatpush1.bf16.msra.mxu0 %v671
  %940 = vmatprep.subr.bf16.mxu0 %v670
  %941 = vmatpush1.bf16.msra.mxu0 %v669
  %942 = vmatprep.subr.bf16.mxu0 %v668
  %943 = vmatpush1.bf16.msra.mxu0 %v667
  %944 = vmatprep.subr.bf16.mxu0 %v666
  %945 = vmatpush1.bf16.msra.mxu0 %v665
  %946 = vmatprep.subr.bf16.mxu0 %v664
  %947 = vmatpush1.bf16.msra.mxu0 %v663
  %948 = vmatprep.subr.bf16.mxu0 %v694
  %949 = vmatpush2.bf16.msra.mxu0 %v693
  %950 = vmatprep.subr.bf16.mxu0 %v692
  %951 = vmatpush2.bf16.msra.mxu0 %v691
  %952 = vmatprep.subr.bf16.mxu0 %v690
  %953 = vmatpush2.bf16.msra.mxu0 %v689
  %954 = vmatprep.subr.bf16.mxu0 %v688
  %955 = vmatpush2.bf16.msra.mxu0 %v687
  %956 = vmatprep.subr.bf16.mxu0 %v686
  %957 = vmatpush2.bf16.msra.mxu0 %v685
  %958 = vmatprep.subr.bf16.mxu0 %v684
  %959 = vmatpush2.bf16.msra.mxu0 %v683
  %960 = vmatprep.subr.bf16.mxu0 %v682
  %961 = vmatpush2.bf16.msra.mxu0 %v681
  %962 = vmatprep.subr.bf16.mxu0 %v680
  %963 = vmatpush2.bf16.msra.mxu0 %v679
  %964 = vmatprep.mubr.bf16.mxu0 %v330
  %965 = vmatmul.mubr.bf16.gmra.mxu0 %v329
  %v966 = vpop.f32.mrf.mxu0
  %v967 = vadd.f32 %v794, %v966
  %v968 = vpop.f32.mrf.mxu0
  %v969 = vadd.f32 %v796, %v968
  %v970 = vpop.f32.mrf.mxu0
  %v971 = vadd.f32 %v798, %v970
  %v972 = vpop.f32.mrf.mxu0
  %v973 = vadd.f32 %v800, %v972
  %974 = vmatprep.mubr.bf16.mxu0 %v334
  %975 = vmatmul.mubr.bf16.gmra.mxu0 %v333
  %v976 = vpop.f32.mrf.mxu0
  %v977 = vadd.f32 %v804, %v976
  %v978 = vpop.f32.mrf.mxu0
  %v979 = vadd.f32 %v806, %v978
  %v980 = vpop.f32.mrf.mxu0
  %v981 = vadd.f32 %v808, %v980
  %v982 = vpop.f32.mrf.mxu0
  %v983 = vadd.f32 %v810, %v982
  %984 = vmatprep.mubr.bf16.mxu0 %v338
  %985 = vmatmul.mubr.bf16.gmra.mxu0 %v337
  %v986 = vpop.f32.mrf.mxu0
  %v987 = vadd.f32 %v814, %v986
  %v988 = vpop.f32.mrf.mxu0
  %v989 = vadd.f32 %v816, %v988
  %v990 = vpop.f32.mrf.mxu0
  %v991 = vadd.f32 %v818, %v990
  %v992 = vpop.f32.mrf.mxu0
  %v993 = vadd.f32 %v820, %v992
  %994 = vmatprep.mubr.bf16.mxu0 %v342
  %995 = vmatmul.mubr.bf16.gmra.mxu0 %v341
  %v996 = vpop.f32.mrf.mxu0
  %v997 = vadd.f32 %v824, %v996
  %v998 = vpop.f32.mrf.mxu0
  %v999 = vadd.f32 %v826, %v998
  %v1000 = vpop.f32.mrf.mxu0
  %v1001 = vadd.f32 %v828, %v1000
  %v1002 = vpop.f32.mrf.mxu0
  %v1003 = vadd.f32 %v830, %v1002
  %1004 = vmatprep.mubr.bf16.mxu0 %v346
  %1005 = vmatmul.mubr.bf16.gmra.mxu0 %v345
  %v1006 = vpop.f32.mrf.mxu0
  %v1007 = vadd.f32 %v834, %v1006
  %v1008 = vpop.f32.mrf.mxu0
  %v1009 = vadd.f32 %v836, %v1008
  %v1010 = vpop.f32.mrf.mxu0
  %v1011 = vadd.f32 %v838, %v1010
  %v1012 = vpop.f32.mrf.mxu0
  %v1013 = vadd.f32 %v840, %v1012
  %1014 = vmatprep.mubr.bf16.mxu0 %v350
  %1015 = vmatmul.mubr.bf16.gmra.mxu0 %v349
  %v1016 = vpop.f32.mrf.mxu0
  %v1017 = vadd.f32 %v844, %v1016
  %v1018 = vpop.f32.mrf.mxu0
  %v1019 = vadd.f32 %v846, %v1018
  %v1020 = vpop.f32.mrf.mxu0
  %v1021 = vadd.f32 %v848, %v1020
  %v1022 = vpop.f32.mrf.mxu0
  %v1023 = vadd.f32 %v850, %v1022
  %1024 = vmatprep.mubr.bf16.mxu0 %v354
  %1025 = vmatmul.mubr.bf16.gmra.mxu0 %v353
  %v1026 = vpop.f32.mrf.mxu0
  %v1027 = vadd.f32 %v854, %v1026
  %v1028 = vpop.f32.mrf.mxu0
  %v1029 = vadd.f32 %v856, %v1028
  %v1030 = vpop.f32.mrf.mxu0
  %v1031 = vadd.f32 %v858, %v1030
  %v1032 = vpop.f32.mrf.mxu0
  %v1033 = vadd.f32 %v860, %v1032
  %1034 = vmatprep.mubr.bf16.mxu0 %v358
  %1035 = vmatmul.mubr.bf16.gmra.mxu0 %v357
  %v1036 = vpop.f32.mrf.mxu0
  %v1037 = vadd.f32 %v864, %v1036
  %v1038 = vpop.f32.mrf.mxu0
  %v1039 = vadd.f32 %v866, %v1038
  %v1040 = vpop.f32.mrf.mxu0
  %v1041 = vadd.f32 %v868, %v1040
  %v1042 = vpop.f32.mrf.mxu0
  %v1043 = vadd.f32 %v870, %v1042
  %1044 = vmatprep.mubr.bf16.mxu0 %v362
  %1045 = vmatmul.mubr.bf16.gmra.mxu0 %v361
  %v1046 = vpop.f32.mrf.mxu0
  %v1047 = vadd.f32 %v874, %v1046
  %v1048 = vpop.f32.mrf.mxu0
  %v1049 = vadd.f32 %v876, %v1048
  %v1050 = vpop.f32.mrf.mxu0
  %v1051 = vadd.f32 %v878, %v1050
  %v1052 = vpop.f32.mrf.mxu0
  %v1053 = vadd.f32 %v880, %v1052
  %1054 = vmatprep.mubr.bf16.mxu0 %v366
  %1055 = vmatmul.mubr.bf16.gmra.mxu0 %v365
  %v1056 = vpop.f32.mrf.mxu0
  %v1057 = vadd.f32 %v884, %v1056
  %v1058 = vpop.f32.mrf.mxu0
  %v1059 = vadd.f32 %v886, %v1058
  %v1060 = vpop.f32.mrf.mxu0
  %v1061 = vadd.f32 %v888, %v1060
  %v1062 = vpop.f32.mrf.mxu0
  %v1063 = vadd.f32 %v890, %v1062
  %1064 = vmatprep.mubr.bf16.mxu0 %v370
  %1065 = vmatmul.mubr.bf16.gmra.mxu0 %v369
  %v1066 = vpop.f32.mrf.mxu0
  %v1067 = vadd.f32 %v894, %v1066
  %v1068 = vpop.f32.mrf.mxu0
  %v1069 = vadd.f32 %v896, %v1068
  %v1070 = vpop.f32.mrf.mxu0
  %v1071 = vadd.f32 %v898, %v1070
  %v1072 = vpop.f32.mrf.mxu0
  %v1073 = vadd.f32 %v900, %v1072
  %1074 = vmatprep.mubr.bf16.mxu0 %v374
  %1075 = vmatmul.mubr.bf16.gmra.mxu0 %v373
  %v1076 = vpop.f32.mrf.mxu0
  %v1077 = vadd.f32 %v904, %v1076
  %v1078 = vpop.f32.mrf.mxu0
  %v1079 = vadd.f32 %v906, %v1078
  %v1080 = vpop.f32.mrf.mxu0
  %v1081 = vadd.f32 %v908, %v1080
  %v1082 = vpop.f32.mrf.mxu0
  %v1083 = vadd.f32 %v910, %v1082
  %1084 = vmatprep.mubr.bf16.mxu0 %v378
  %1085 = vmatmul.mubr.bf16.gmra.mxu0 %v377
  %v1086 = vpop.f32.mrf.mxu0
  %v1087 = vadd.f32 %v914, %v1086
  %v1088 = vpop.f32.mrf.mxu0
  %v1089 = vadd.f32 %v916, %v1088
  %v1090 = vpop.f32.mrf.mxu0
  %v1091 = vadd.f32 %v918, %v1090
  %v1092 = vpop.f32.mrf.mxu0
  %v1093 = vadd.f32 %v920, %v1092
  %1094 = vmatprep.mubr.bf16.mxu0 %v382
  %1095 = vmatmul.mubr.bf16.gmra.mxu0 %v381
  %v1096 = vpop.f32.mrf.mxu0
  %v1097 = vadd.f32 %v924, %v1096
  %v1098 = vpop.f32.mrf.mxu0
  %v1099 = vadd.f32 %v926, %v1098
  %v1100 = vpop.f32.mrf.mxu0
  %v1101 = vadd.f32 %v928, %v1100
  %v1102 = vpop.f32.mrf.mxu0
  %v1103 = vadd.f32 %v930, %v1102
  %1104 = vdwg.mxu0
  %v1105 = vmax.f32 %v967, %v1037
  %v1106 = vmax.f32 %v969, %v1039
  %v1107 = vmax.f32 %v971, %v1041
  %v1108 = vmax.f32 %v973, %v1043
  %v1109 = vmax.f32 %v977, %v1047
  %v1110 = vmax.f32 %v979, %v1049
  %v1111 = vmax.f32 %v981, %v1051
  %v1112 = vmax.f32 %v983, %v1053
  %v1113 = vmax.f32 %v987, %v1057
  %v1114 = vmax.f32 %v989, %v1059
  %v1115 = vmax.f32 %v991, %v1061
  %v1116 = vmax.f32 %v993, %v1063
  %v1117 = vmax.f32 %v997, %v1067
  %v1118 = vmax.f32 %v999, %v1069
  %v1119 = vmax.f32 %v1001, %v1071
  %v1120 = vmax.f32 %v1003, %v1073
  %v1121 = vmax.f32 %v1007, %v1077
  %v1122 = vmax.f32 %v1009, %v1079
  %v1123 = vmax.f32 %v1011, %v1081
  %v1124 = vmax.f32 %v1013, %v1083
  %v1125 = vmax.f32 %v1017, %v1087
  %v1126 = vmax.f32 %v1019, %v1089
  %v1127 = vmax.f32 %v1021, %v1091
  %v1128 = vmax.f32 %v1023, %v1093
  %v1129 = vmax.f32 %v1027, %v1097
  %v1130 = vmax.f32 %v1029, %v1099
  %v1131 = vmax.f32 %v1031, %v1101
  %v1132 = vmax.f32 %v1033, %v1103
  %v1133 = vld [vmem:[%s2] sm:$0x3]
  %v1135 = vlaneseq
  %v1136 = vshrl.u32 %v1135, 7
  %v1137 = vsub.s32 0, %v1136
  %v1138 = vrot.slane %v1133, %v1137
  %v1139 = vlaneseq
  %v1140 = vshrl.u32 %v1139, 7
  %v1141 = vsub.s32 1, %v1140
  %v1142 = vrot.slane %v1133, %v1141
  %v1145 = vadd.f32 %v1105, %v1138
  %v1146 = vadd.f32 %v1106, %v1142
  %v1147 = vadd.f32 %v1107, %v1138
  %v1148 = vadd.f32 %v1108, %v1142
  %v1149 = vadd.f32 %v1109, %v1138
  %v1150 = vadd.f32 %v1110, %v1142
  %v1151 = vadd.f32 %v1111, %v1138
  %v1152 = vadd.f32 %v1112, %v1142
  %v1153 = vadd.f32 %v1113, %v1138
  %v1154 = vadd.f32 %v1114, %v1142
  %v1155 = vadd.f32 %v1115, %v1138
  %v1156 = vadd.f32 %v1116, %v1142
  %v1157 = vadd.f32 %v1117, %v1138
  %v1158 = vadd.f32 %v1118, %v1142
  %v1159 = vadd.f32 %v1119, %v1138
  %v1160 = vadd.f32 %v1120, %v1142
  %v1161 = vadd.f32 %v1121, %v1138
  %v1162 = vadd.f32 %v1122, %v1142
  %v1163 = vadd.f32 %v1123, %v1138
  %v1164 = vadd.f32 %v1124, %v1142
  %v1165 = vadd.f32 %v1125, %v1138
  %v1166 = vadd.f32 %v1126, %v1142
  %v1167 = vadd.f32 %v1127, %v1138
  %v1168 = vadd.f32 %v1128, %v1142
  %v1169 = vadd.f32 %v1129, %v1138
  %v1170 = vadd.f32 %v1130, %v1142
  %v1171 = vadd.f32 %v1131, %v1138
  %v1172 = vadd.f32 %v1132, %v1142
  %v1173 = vmax.f32 %v1145, 0.0
  %v1174 = vmax.f32 %v1146, 0.0
  %v1175 = vmax.f32 %v1147, 0.0
  %v1176 = vmax.f32 %v1148, 0.0
  %v1177 = vmax.f32 %v1149, 0.0
  %v1178 = vmax.f32 %v1150, 0.0
  %v1179 = vmax.f32 %v1151, 0.0
  %v1180 = vmax.f32 %v1152, 0.0
  %v1181 = vmax.f32 %v1153, 0.0
  %v1182 = vmax.f32 %v1154, 0.0
  %v1183 = vmax.f32 %v1155, 0.0
  %v1184 = vmax.f32 %v1156, 0.0
  %v1185 = vmax.f32 %v1157, 0.0
  %v1186 = vmax.f32 %v1158, 0.0
  %v1187 = vmax.f32 %v1159, 0.0
  %v1188 = vmax.f32 %v1160, 0.0
  %v1189 = vmax.f32 %v1161, 0.0
  %v1190 = vmax.f32 %v1162, 0.0
  %v1191 = vmax.f32 %v1163, 0.0
  %v1192 = vmax.f32 %v1164, 0.0
  %v1193 = vmax.f32 %v1165, 0.0
  %v1194 = vmax.f32 %v1166, 0.0
  %v1195 = vmax.f32 %v1167, 0.0
  %v1196 = vmax.f32 %v1168, 0.0
  %v1197 = vmax.f32 %v1169, 0.0
  %v1198 = vmax.f32 %v1170, 0.0
  %v1199 = vmax.f32 %v1171, 0.0
  %v1200 = vmax.f32 %v1172, 0.0
  %v1201 = vmax.f32 %v1173, %v1174
  %v1202 = vmax.f32 %v1175, %v1176
  %v1203 = vmax.f32 %v1177, %v1178
  %v1204 = vmax.f32 %v1179, %v1180
  %v1205 = vmax.f32 %v1181, %v1182
  %v1206 = vmax.f32 %v1183, %v1184
  %v1207 = vmax.f32 %v1185, %v1186
  %v1208 = vmax.f32 %v1187, %v1188
  %v1209 = vmax.f32 %v1189, %v1190
  %v1210 = vmax.f32 %v1191, %v1192
  %v1211 = vmax.f32 %v1193, %v1194
  %v1212 = vmax.f32 %v1195, %v1196
  %v1213 = vmax.f32 %v1197, %v1198
  %v1214 = vmax.f32 %v1199, %v1200
  %v1215 = vpack.c.bf16 %v1202, %v1201
  %v1216 = vpack.c.bf16 %v1203, %v1202
  %v1217 = vpack.c.bf16 %v1204, %v1203
  %v1218 = vpack.c.bf16 %v1205, %v1204
  %v1219 = vpack.c.bf16 %v1206, %v1205
  %v1220 = vpack.c.bf16 %v1207, %v1206
  %v1221 = vpack.c.bf16 %v1208, %v1207
  %v1222 = vpack.c.bf16 %v1209, %v1208
  %v1223 = vpack.c.bf16 %v1210, %v1209
  %v1224 = vpack.c.bf16 %v1211, %v1210
  %v1225 = vpack.c.bf16 %v1212, %v1211
  %v1226 = vpack.c.bf16 %v1213, %v1212
  %v1227 = vpack.c.bf16 %v1214, %v1213
  %v1228 = vld [vmem:[%s3] sm:$0xff]
  %v1229 = vld [vmem:[%s3 + $0x8] sm:$0xff]
  %v1230 = vld [vmem:[%s3 + $0x10] sm:$0xff]
  %v1231 = vld [vmem:[%s3 + $0x18] sm:$0xff]
  %v1232 = vld [vmem:[%s3 + $0x20] sm:$0xff]
  %v1233 = vld [vmem:[%s3 + $0x28] sm:$0xff]
  %v1234 = vld [vmem:[%s3 + $0x30] sm:$0xff]
  %v1235 = vld [vmem:[%s3 + $0x38] sm:$0xff]
  %v1236 = vld [vmem:[%s3 + $0x40] sm:$0xff]
  %v1237 = vld [vmem:[%s3 + $0x48] sm:$0xff]
  %v1238 = vld [vmem:[%s3 + $0x50] sm:$0xff]
  %v1239 = vld [vmem:[%s3 + $0x58] sm:$0xff]
  %v1240 = vld [vmem:[%s3 + $0x60] sm:$0xff]
  %v1241 = vld [vmem:[%s3 + $0x68] sm:$0xff]
  %v1242 = vld [vmem:[%s3 + $0x70] sm:$0xff]
  %v1243 = vld [vmem:[%s3 + $0x78] sm:$0xff]
  %v1244 = vld [vmem:[%s3 + $0x80] sm:$0xff]
  %v1245 = vld [vmem:[%s3 + $0x88] sm:$0xff]
  %v1246 = vld [vmem:[%s3 + $0x90] sm:$0xff]
  %v1247 = vld [vmem:[%s3 + $0x98] sm:$0xff]
  %v1248 = vld [vmem:[%s3 + $0xa0] sm:$0xff]
  %v1249 = vld [vmem:[%s3 + $0xa8] sm:$0xff]
  %v1250 = vld [vmem:[%s3 + $0xb0] sm:$0xff]
  %v1251 = vld [vmem:[%s3 + $0xb8] sm:$0xff]
  %v1252 = vld [vmem:[%s3 + $0xc0] sm:$0xff]
  %v1253 = vld [vmem:[%s3 + $0xc8] sm:$0xff]
  %v1254 = vld [vmem:[%s3 + $0xd0] sm:$0xff]
  %v1255 = vld [vmem:[%s3 + $0xd8] sm:$0xff]
  %v1256 = vld [vmem:[%s3 + $0xe0] sm:$0xff]
  %v1257 = vld [vmem:[%s3 + $0xe8] sm:$0xff]
  %v1258 = vld [vmem:[%s3 + $0xf0] sm:$0xff]
  %v1259 = vld [vmem:[%s3 + $0xf8] sm:$0xff]
  %v1260 = vld [vmem:[%s3 + $0x100] sm:$0xff]
  %v1261 = vld [vmem:[%s3 + $0x108] sm:$0xff]
  %v1262 = vld [vmem:[%s3 + $0x110] sm:$0xff]
  %v1263 = vld [vmem:[%s3 + $0x118] sm:$0xff]
  %v1264 = vld [vmem:[%s3 + $0x120] sm:$0xff]
  %v1265 = vld [vmem:[%s3 + $0x128] sm:$0xff]
  %v1266 = vld [vmem:[%s3 + $0x130] sm:$0xff]
  %v1267 = vld [vmem:[%s3 + $0x138] sm:$0xff]
  %v1268 = vld [vmem:[%s3 + $0x140] sm:$0xff]
  %v1269 = vld [vmem:[%s3 + $0x148] sm:$0xff]
  %v1270 = vld [vmem:[%s3 + $0x150] sm:$0xff]
  %v1271 = vld [vmem:[%s3 + $0x158] sm:$0xff]
  %v1272 = vld [vmem:[%s3 + $0x160] sm:$0xff]
  %v1273 = vld [vmem:[%s3 + $0x168] sm:$0xff]
  %v1274 = vld [vmem:[%s3 + $0x170] sm:$0xff]
  %v1275 = vld [vmem:[%s3 + $0x178] sm:$0xff]
  %v1276 = vld [vmem:[%s3 + $0x180] sm:$0xff]
  %v1277 = vld [vmem:[%s3 + $0x188] sm:$0xff]
  %v1278 = vld [vmem:[%s3 + $0x190] sm:$0xff]
  %v1279 = vld [vmem:[%s3 + $0x198] sm:$0xff]
  %v1280 = vld [vmem:[%s3 + $0x1a0] sm:$0xff]
  %v1281 = vld [vmem:[%s3 + $0x1a8] sm:$0xff]
  %v1282 = vld [vmem:[%s3 + $0x1b0] sm:$0xff]
  %v1283 = vld [vmem:[%s3 + $0x1b8] sm:$0xff]
  %v1284 = vld [vmem:[%s3 + $0x1c0] sm:$0xff]
  %v1285 = vld [vmem:[%s3 + $0x1c8] sm:$0xff]
  %v1286 = vld [vmem:[%s3 + $0x1d0] sm:$0xff]
  %v1287 = vld [vmem:[%s3 + $0x1d8] sm:$0xff]
  %v1288 = vld [vmem:[%s3 + $0x1e0] sm:$0xff]
  %v1289 = vld [vmem:[%s3 + $0x1e8] sm:$0xff]
  %v1290 = vld [vmem:[%s3 + $0x1f0] sm:$0xff]
  %v1291 = vld [vmem:[%s3 + $0x1f8] sm:$0xff]
  %v1292 = vld [vmem:[%s3 + $0x200] sm:$0xff]
  %v1293 = vld [vmem:[%s3 + $0x208] sm:$0xff]
  %v1294 = vld [vmem:[%s3 + $0x210] sm:$0xff]
  %v1295 = vld [vmem:[%s3 + $0x218] sm:$0xff]
  %v1296 = vld [vmem:[%s3 + $0x220] sm:$0xff]
  %v1297 = vld [vmem:[%s3 + $0x228] sm:$0xff]
  %v1298 = vld [vmem:[%s3 + $0x230] sm:$0xff]
  %v1299 = vld [vmem:[%s3 + $0x238] sm:$0xff]
  %v1300 = vld [vmem:[%s3 + $0x240] sm:$0xff]
  %v1301 = vld [vmem:[%s3 + $0x248] sm:$0xff]
  %v1302 = vld [vmem:[%s3 + $0x250] sm:$0xff]
  %v1303 = vld [vmem:[%s3 + $0x258] sm:$0xff]
  %v1304 = vld [vmem:[%s3 + $0x260] sm:$0xff]
  %v1305 = vld [vmem:[%s3 + $0x268] sm:$0xff]
  %v1306 = vld [vmem:[%s3 + $0x270] sm:$0xff]
  %v1307 = vld [vmem:[%s3 + $0x278] sm:$0xff]
  %v1308 = vld [vmem:[%s4] sm:$0x3]
  %v1310 = vlaneseq
  %v1311 = vshrl.u32 %v1310, 7
  %v1312 = vsub.s32 0, %v1311
  %v1313 = vrot.slane %v1308, %v1312
  %v1314 = vlaneseq
  %v1315 = vshrl.u32 %v1314, 7
  %v1316 = vsub.s32 1, %v1315
  %v1317 = vrot.slane %v1308, %v1316
  %v1400 = vunpack.c.l.b16 %v1228
  %v1401 = vunpack.c.h.b16 %v1228
  %v1402 = vunpack.c.l.b16 %v1229
  %v1403 = vunpack.c.h.b16 %v1229
  %v1404 = vunpack.c.l.b16 %v1230
  %v1405 = vunpack.c.h.b16 %v1230
  %v1406 = vunpack.c.l.b16 %v1231
  %v1407 = vunpack.c.h.b16 %v1231
  %v1408 = vunpack.c.l.b16 %v1232
  %v1409 = vunpack.c.h.b16 %v1232
  %v1410 = vunpack.c.l.b16 %v1233
  %v1411 = vunpack.c.h.b16 %v1233
  %v1412 = vunpack.c.l.b16 %v1234
  %v1413 = vunpack.c.h.b16 %v1234
  %v1414 = vunpack.c.l.b16 %v1235
  %v1415 = vunpack.c.h.b16 %v1235
  %v1416 = vunpack.c.l.b16 %v1236
  %v1417 = vunpack.c.h.b16 %v1236
  %v1418 = vunpack.c.l.b16 %v1237
  %v1419 = vunpack.c.h.b16 %v1237
  %v1420 = vunpack.c.l.b16 %v1238
  %v1421 = vunpack.c.h.b16 %v1238
  %v1422 = vunpack.c.l.b16 %v1239
  %v1423 = vunpack.c.h.b16 %v1239
  %v1424 = vunpack.c.l.b16 %v1240
  %v1425 = vunpack.c.h.b16 %v1240
  %v1426 = vunpack.c.l.b16 %v1241
  %v1427 = vunpack.c.h.b16 %v1241
  %v1428 = vunpack.c.l.b16 %v1242
  %v1429 = vunpack.c.h.b16 %v1242
  %v1430 = vunpack.c.l.b16 %v1243
  %v1431 = vunpack.c.h.b16 %v1243
  %v1432 = vunpack.c.l.b16 %v1244
  %v1433 = vunpack.c.h.b16 %v1244
  %v1434 = vunpack.c.l.b16 %v1245
  %v1435 = vunpack.c.h.b16 %v1245
  %v1436 = vunpack.c.l.b16 %v1246
  %v1437 = vunpack.c.h.b16 %v1246
  %v1438 = vunpack.c.l.b16 %v1247
  %v1439 = vunpack.c.h.b16 %v1247
  %v1440 = vunpack.c.l.b16 %v1248
  %v1441 = vunpack.c.h.b16 %v1248
  %v1442 = vunpack.c.l.b16 %v1249
  %v1443 = vunpack.c.h.b16 %v1249
  %v1444 = vunpack.c.l.b16 %v1250
  %v1445 = vunpack.c.h.b16 %v1250
  %v1446 = vunpack.c.l.b16 %v1251
  %v1447 = vunpack.c.h.b16 %v1251
  %v1448 = vunpack.c.l.b16 %v1252
  %v1449 = vunpack.c.h.b16 %v1252
  %v1450 = vunpack.c.l.b16 %v1253
  %v1451 = vunpack.c.h.b16 %v1253
  %v1452 = vunpack.c.l.b16 %v1254
  %v1453 = vunpack.c.h.b16 %v1254
  %v1454 = vunpack.c.l.b16 %v1255
  %v1455 = vunpack.c.h.b16 %v1255
  %v1456 = vunpack.c.l.b16 %v1256
  %v1457 = vunpack.c.h.b16 %v1256
  %v1458 = vunpack.c.l.b16 %v1257
  %v1459 = vunpack.c.h.b16 %v1257
  %v1460 = vunpack.c.l.b16 %v1258
  %v1461 = vunpack.c.h.b16 %v1258
  %v1462 = vunpack.c.l.b16 %v1259
  %v1463 = vunpack.c.h.b16 %v1259
  %v1464 = vunpack.c.l.b16 %v1260
  %v1465 = vunpack.c.h.b16 %v1260
  %v1466 = vunpack.c.l.b16 %v1261
  %v1467 = vunpack.c.h.b16 %v1261
  %v1468 = vunpack.c.l.b16 %v1262
  %v1469 = vunpack.c.h.b16 %v1262
  %v1470 = vunpack.c.l.b16 %v1263
  %v1471 = vunpack.c.h.b16 %v1263
  %v1472 = vunpack.c.l.b16 %v1264
  %v1473 = vunpack.c.h.b16 %v1264
  %v1474 = vunpack.c.l.b16 %v1265
  %v1475 = vunpack.c.h.b16 %v1265
  %v1476 = vunpack.c.l.b16 %v1266
  %v1477 = vunpack.c.h.b16 %v1266
  %v1478 = vunpack.c.l.b16 %v1267
  %v1479 = vunpack.c.h.b16 %v1267
  %v1480 = vunpack.c.l.b16 %v1268
  %v1481 = vunpack.c.h.b16 %v1268
  %v1482 = vunpack.c.l.b16 %v1269
  %v1483 = vunpack.c.h.b16 %v1269
  %v1484 = vunpack.c.l.b16 %v1270
  %v1485 = vunpack.c.h.b16 %v1270
  %v1486 = vunpack.c.l.b16 %v1271
  %v1487 = vunpack.c.h.b16 %v1271
  %v1488 = vunpack.c.l.b16 %v1272
  %v1489 = vunpack.c.h.b16 %v1272
  %v1490 = vunpack.c.l.b16 %v1273
  %v1491 = vunpack.c.h.b16 %v1273
  %v1492 = vunpack.c.l.b16 %v1274
  %v1493 = vunpack.c.h.b16 %v1274
  %v1494 = vunpack.c.l.b16 %v1275
  %v1495 = vunpack.c.h.b16 %v1275
  %v1496 = vunpack.c.l.b16 %v1276
  %v1497 = vunpack.c.h.b16 %v1276
  %v1498 = vunpack.c.l.b16 %v1277
  %v1499 = vunpack.c.h.b16 %v1277
  %v1500 = vunpack.c.l.b16 %v1278
  %v1501 = vunpack.c.h.b16 %v1278
  %v1502 = vunpack.c.l.b16 %v1279
  %v1503 = vunpack.c.h.b16 %v1279
  %v1504 = vunpack.c.l.b16 %v1280
  %v1505 = vunpack.c.h.b16 %v1280
  %v1506 = vunpack.c.l.b16 %v1281
  %v1507 = vunpack.c.h.b16 %v1281
  %v1508 = vunpack.c.l.b16 %v1282
  %v1509 = vunpack.c.h.b16 %v1282
  %v1510 = vunpack.c.l.b16 %v1283
  %v1511 = vunpack.c.h.b16 %v1283
  %v1512 = vunpack.c.l.b16 %v1284
  %v1513 = vunpack.c.h.b16 %v1284
  %v1514 = vunpack.c.l.b16 %v1285
  %v1515 = vunpack.c.h.b16 %v1285
  %v1516 = vunpack.c.l.b16 %v1286
  %v1517 = vunpack.c.h.b16 %v1286
  %v1518 = vunpack.c.l.b16 %v1287
  %v1519 = vunpack.c.h.b16 %v1287
  %v1520 = vunpack.c.l.b16 %v1288
  %v1521 = vunpack.c.h.b16 %v1288
  %v1522 = vunpack.c.l.b16 %v1289
  %v1523 = vunpack.c.h.b16 %v1289
  %v1524 = vunpack.c.l.b16 %v1290
  %v1525 = vunpack.c.h.b16 %v1290
  %v1526 = vunpack.c.l.b16 %v1291
  %v1527 = vunpack.c.h.b16 %v1291
  %v1528 = vunpack.c.l.b16 %v1292
  %v1529 = vunpack.c.h.b16 %v1292
  %v1530 = vunpack.c.l.b16 %v1293
  %v1531 = vunpack.c.h.b16 %v1293
  %v1532 = vunpack.c.l.b16 %v1294
  %v1533 = vunpack.c.h.b16 %v1294
  %v1534 = vunpack.c.l.b16 %v1295
  %v1535 = vunpack.c.h.b16 %v1295
  %v1536 = vunpack.c.l.b16 %v1296
  %v1537 = vunpack.c.h.b16 %v1296
  %v1538 = vunpack.c.l.b16 %v1297
  %v1539 = vunpack.c.h.b16 %v1297
  %v1540 = vunpack.c.l.b16 %v1298
  %v1541 = vunpack.c.h.b16 %v1298
  %v1542 = vunpack.c.l.b16 %v1299
  %v1543 = vunpack.c.h.b16 %v1299
  %v1544 = vunpack.c.l.b16 %v1300
  %v1545 = vunpack.c.h.b16 %v1300
  %v1546 = vunpack.c.l.b16 %v1301
  %v1547 = vunpack.c.h.b16 %v1301
  %v1548 = vunpack.c.l.b16 %v1302
  %v1549 = vunpack.c.h.b16 %v1302
  %v1550 = vunpack.c.l.b16 %v1303
  %v1551 = vunpack.c.h.b16 %v1303
  %v1552 = vunpack.c.l.b16 %v1304
  %v1553 = vunpack.c.h.b16 %v1304
  %v1554 = vunpack.c.l.b16 %v1305
  %v1555 = vunpack.c.h.b16 %v1305
  %v1556 = vunpack.c.l.b16 %v1306
  %v1557 = vunpack.c.h.b16 %v1306
  %v1558 = vunpack.c.l.b16 %v1307
  %v1559 = vunpack.c.h.b16 %v1307
  %v1560 = vpack.c.b16 %v1402, %v1400
  %v1561 = vpack.c.b16 %v1403, %v1401
  %v1562 = vpack.c.b16 %v1406, %v1404
  %v1563 = vpack.c.b16 %v1407, %v1405
  %v1564 = vpack.c.b16 %v1410, %v1408
  %v1565 = vpack.c.b16 %v1411, %v1409
  %v1566 = vpack.c.b16 %v1414, %v1412
  %v1567 = vpack.c.b16 %v1415, %v1413
  %v1568 = vpack.c.b16 %v1418, %v1416
  %v1569 = vpack.c.b16 %v1419, %v1417
  %v1570 = vpack.c.b16 %v1422, %v1420
  %v1571 = vpack.c.b16 %v1423, %v1421
  %v1572 = vpack.c.b16 %v1426, %v1424
  %v1573 = vpack.c.b16 %v1427, %v1425
  %v1574 = vpack.c.b16 %v1430, %v1428
  %v1575 = vpack.c.b16 %v1431, %v1429
  %v1576 = vpack.c.b16 %v1434, %v1432
  %v1577 = vpack.c.b16 %v1435, %v1433
  %v1578 = vpack.c.b16 %v1438, %v1436
  %v1579 = vpack.c.b16 %v1439, %v1437
  %v1580 = vpack.c.b16 %v1442, %v1440
  %v1581 = vpack.c.b16 %v1443, %v1441
  %v1582 = vpack.c.b16 %v1446, %v1444
  %v1583 = vpack.c.b16 %v1447, %v1445
  %v1584 = vpack.c.b16 %v1450, %v1448
  %v1585 = vpack.c.b16 %v1451, %v1449
  %v1586 = vpack.c.b16 %v1454, %v1452
  %v1587 = vpack.c.b16 %v1455, %v1453
  %v1588 = vpack.c.b16 %v1458, %v1456
  %v1589 = vpack.c.b16 %v1459, %v1457
  %v1590 = vpack.c.b16 %v1462, %v1460
  %v1591 = vpack.c.b16 %v1463, %v1461
  %v1592 = vpack.c.b16 %v1466, %v1464
  %v1593 = vpack.c.b16 %v1467, %v1465
  %v1594 = vpack.c.b16 %v1470, %v1468
  %v1595 = vpack.c.b16 %v1471, %v1469
  %v1596 = vpack.c.b16 %v1474, %v1472
  %v1597 = vpack.c.b16 %v1475, %v1473
  %v1598 = vpack.c.b16 %v1478, %v1476
  %v1599 = vpack.c.b16 %v1479, %v1477
  %v1600 = vpack.c.b16 %v1482, %v1480
  %v1601 = vpack.c.b16 %v1483, %v1481
  %v1602 = vpack.c.b16 %v1486, %v1484
  %v1603 = vpack.c.b16 %v1487, %v1485
  %v1604 = vpack.c.b16 %v1490, %v1488
  %v1605 = vpack.c.b16 %v1491, %v1489
  %v1606 = vpack.c.b16 %v1494, %v1492
  %v1607 = vpack.c.b16 %v1495, %v1493
  %v1608 = vpack.c.b16 %v1498, %v1496
  %v1609 = vpack.c.b16 %v1499, %v1497
  %v1610 = vpack.c.b16 %v1502, %v1500
  %v1611 = vpack.c.b16 %v1503, %v1501
  %v1612 = vpack.c.b16 %v1506, %v1504
  %v1613 = vpack.c.b16 %v1507, %v1505
  %v1614 = vpack.c.b16 %v1510, %v1508
  %v1615 = vpack.c.b16 %v1511, %v1509
  %v1616 = vpack.c.b16 %v1514, %v1512
  %v1617 = vpack.c.b16 %v1515, %v1513
  %v1618 = vpack.c.b16 %v1518, %v1516
  %v1619 = vpack.c.b16 %v1519, %v1517
  %v1620 = vpack.c.b16 %v1522, %v1520
  %v1621 = vpack.c.b16 %v1523, %v1521
  %v1622 = vpack.c.b16 %v1526, %v1524
  %v1623 = vpack.c.b16 %v1527, %v1525
  %v1624 = vpack.c.b16 %v1530, %v1528
  %v1625 = vpack.c.b16 %v1531, %v1529
  %v1626 = vpack.c.b16 %v1534, %v1532
  %v1627 = vpack.c.b16 %v1535, %v1533
  %v1628 = vpack.c.b16 %v1538, %v1536
  %v1629 = vpack.c.b16 %v1539, %v1537
  %v1630 = vpack.c.b16 %v1542, %v1540
  %v1631 = vpack.c.b16 %v1543, %v1541
  %v1632 = vpack.c.b16 %v1546, %v1544
  %v1633 = vpack.c.b16 %v1547, %v1545
  %v1634 = vpack.c.b16 %v1550, %v1548
  %v1635 = vpack.c.b16 %v1551, %v1549
  %v1636 = vpack.c.b16 %v1554, %v1552
  %v1637 = vpack.c.b16 %v1555, %v1553
  %v1638 = vpack.c.b16 %v1558, %v1556
  %v1639 = vpack.c.b16 %v1559, %v1557
  %1720 = vmatprep.subr.bf16.mxu0 %v1575
  %1721 = vmatpush1.bf16.msra.mxu0 %v1574
  %1722 = vmatprep.subr.bf16.mxu0 %v1573
  %1723 = vmatpush1.bf16.msra.mxu0 %v1572
  %1724 = vmatprep.subr.bf16.mxu0 %v1571
  %1725 = vmatpush1.bf16.msra.mxu0 %v1570
  %1726 = vmatprep.subr.bf16.mxu0 %v1569
  %1727 = vmatpush1.bf16.msra.mxu0 %v1568
  %1728 = vmatprep.subr.bf16.mxu0 %v1567
  %1729 = vmatpush1.bf16.msra.mxu0 %v1566
  %1730 = vmatprep.subr.bf16.mxu0 %v1565
  %1731 = vmatpush1.bf16.msra.mxu0 %v1564
  %1732 = vmatprep.subr.bf16.mxu0 %v1563
  %1733 = vmatpush1.bf16.msra.mxu0 %v1562
  %1734 = vmatprep.subr.bf16.mxu0 %v1561
  %1735 = vmatpush1.bf16.msra.mxu0 %v1560
  %1736 = vmatprep.subr.bf16.mxu0 %v1591
  %1737 = vmatpush2.bf16.msra.mxu0 %v1590
  %1738 = vmatprep.subr.bf16.mxu0 %v1589
  %1739 = vmatpush2.bf16.msra.mxu0 %v1588
  %1740 = vmatprep.subr.bf16.mxu0 %v1587
  %1741 = vmatpush2.bf16.msra.mxu0 %v1586
  %1742 = vmatprep.subr.bf16.mxu0 %v1585
  %1743 = vmatpush2.bf16.msra.mxu0 %v1584
  %1744 = vmatprep.subr.bf16.mxu0 %v1583
  %1745 = vmatpush2.bf16.msra.mxu0 %v1582
  %1746 = vmatprep.subr.bf16.mxu0 %v1581
  %1747 = vmatpush2.bf16.msra.mxu0 %v1580
  %1748 = vmatprep.subr.bf16.mxu0 %v1579
  %1749 = vmatpush2.bf16.msra.mxu0 %v1578
  %1750 = vmatprep.subr.bf16.mxu0 %v1577
  %1751 = vmatpush2.bf16.msra.mxu0 %v1576
  %1752 = vmatprep.mubr.bf16.mxu0 %v1216
  %1753 = vmatmul.mubr.bf16.gmra.mxu0 %v1215
  %v1754 = vpop.f32.mrf.mxu0
  %v1755 = vadd.f32 %v1313, %v1754
  %v1756 = vpop.f32.mrf.mxu0
  %v1757 = vadd.f32 %v1317, %v1756
  %v1758 = vpop.f32.mrf.mxu0
  %v1759 = vadd.f32 %v1313, %v1758
  %v1760 = vpop.f32.mrf.mxu0
  %v1761 = vadd.f32 %v1317, %v1760
  %1762 = vmatprep.mubr.bf16.mxu0 %v1218
  %1763 = vmatmul.mubr.bf16.gmra.mxu0 %v1217
  %v1764 = vpop.f32.mrf.mxu0
  %v1765 = vadd.f32 %v1313, %v1764
  %v1766 = vpop.f32.mrf.mxu0
  %v1767 = vadd.f32 %v1317, %v1766
  %v1768 = vpop.f32.mrf.mxu0
  %v1769 = vadd.f32 %v1313, %v1768
  %v1770 = vpop.f32.mrf.mxu0
  %v1771 = vadd.f32 %v1317, %v1770
  %1772 = vmatprep.mubr.bf16.mxu0 %v1220
  %1773 = vmatmul.mubr.bf16.gmra.mxu0 %v1219
  %v1774 = vpop.f32.mrf.mxu0
  %v1775 = vadd.f32 %v1313, %v1774
  %v1776 = vpop.f32.mrf.mxu0
  %v1777 = vadd.f32 %v1317, %v1776
  %v1778 = vpop.f32.mrf.mxu0
  %v1779 = vadd.f32 %v1313, %v1778
  %v1780 = vpop.f32.mrf.mxu0
  %v1781 = vadd.f32 %v1317, %v1780
  %1782 = vmatprep.mubr.bf16.mxu0 %v1222
  %1783 = vmatmul.mubr.bf16.gmra.mxu0 %v1221
  %v1784 = vpop.f32.mrf.mxu0
  %v1785 = vadd.f32 %v1313, %v1784
  %v1786 = vpop.f32.mrf.mxu0
  %v1787 = vadd.f32 %v1317, %v1786
  %v1788 = vpop.f32.mrf.mxu0
  %v1789 = vadd.f32 %v1313, %v1788
  %v1790 = vpop.f32.mrf.mxu0
  %v1791 = vadd.f32 %v1317, %v1790
  %1792 = vmatprep.mubr.bf16.mxu0 %v1224
  %1793 = vmatmul.mubr.bf16.gmra.mxu0 %v1223
  %v1794 = vpop.f32.mrf.mxu0
  %v1795 = vadd.f32 %v1313, %v1794
  %v1796 = vpop.f32.mrf.mxu0
  %v1797 = vadd.f32 %v1317, %v1796
  %v1798 = vpop.f32.mrf.mxu0
  %v1799 = vadd.f32 %v1313, %v1798
  %v1800 = vpop.f32.mrf.mxu0
  %v1801 = vadd.f32 %v1317, %v1800
  %1802 = vdwg.mxu0
  %1803 = vmatprep.subr.bf16.mxu0 %v1607
  %1804 = vmatpush1.bf16.msra.mxu0 %v1606
  %1805 = vmatprep.subr.bf16.mxu0 %v1605
  %1806 = vmatpush1.bf16.msra.mxu0 %v1604
  %1807 = vmatprep.subr.bf16.mxu0 %v1603
  %1808 = vmatpush1.bf16.msra.mxu0 %v1602
  %1809 = vmatprep.subr.bf16.mxu0 %v1601
  %1810 = vmatpush1.bf16.msra.mxu0 %v1600
  %1811 = vmatprep.subr.bf16.mxu0 %v1599
  %1812 = vmatpush1.bf16.msra.mxu0 %v1598
  %1813 = vmatprep.subr.bf16.mxu0 %v1597
  %1814 = vmatpush1.bf16.msra.mxu0 %v1596
  %1815 = vmatprep.subr.bf16.mxu0 %v1595
  %1816 = vmatpush1.bf16.msra.mxu0 %v1594
  %1817 = vmatprep.subr.bf16.mxu0 %v1593
  %1818 = vmatpush1.bf16.msra.mxu0 %v1592
  %1819 = vmatprep.subr.bf16.mxu0 %v1623
  %1820 = vmatpush2.bf16.msra.mxu0 %v1622
  %1821 = vmatprep.subr.bf16.mxu0 %v1621
  %1822 = vmatpush2.bf16.msra.mxu0 %v1620
  %1823 = vmatprep.subr.bf16.mxu0 %v1619
  %1824 = vmatpush2.bf16.msra.mxu0 %v1618
  %1825 = vmatprep.subr.bf16.mxu0 %v1617
  %1826 = vmatpush2.bf16.msra.mxu0 %v1616
  %1827 = vmatprep.subr.bf16.mxu0 %v1615
  %1828 = vmatpush2.bf16.msra.mxu0 %v1614
  %1829 = vmatprep.subr.bf16.mxu0 %v1613
  %1830 = vmatpush2.bf16.msra.mxu0 %v1612
  %1831 = vmatprep.subr.bf16.mxu0 %v1611
  %1832 = vmatpush2.bf16.msra.mxu0 %v1610
  %1833 = vmatprep.subr.bf16.mxu0 %v1609
  %1834 = vmatpush2.bf16.msra.mxu0 %v1608
  %1835 = vmatprep.mubr.bf16.mxu0 %v1218
  %1836 = vmatmul.mubr.bf16.gmra.mxu0 %v1217
  %v1837 = vpop.f32.mrf.mxu0
  %v1838 = vadd.f32 %v1755, %v1837
  %v1839 = vpop.f32.mrf.mxu0
  %v1840 = vadd.f32 %v1757, %v1839
  %v1841 = vpop.f32.mrf.mxu0
  %v1842 = vadd.f32 %v1759, %v1841
  %v1843 = vpop.f32.mrf.mxu0
  %v1844 = vadd.f32 %v1761, %v1843
  %1845 = vmatprep.mubr.bf16.mxu0 %v1220
  %1846 = vmatmul.mubr.bf16.gmra.mxu0 %v1219
  %v1847 = vpop.f32.mrf.mxu0
  %v1848 = vadd.f32 %v1765, %v1847
  %v1849 = vpop.f32.mrf.mxu0
  %v1850 = vadd.f32 %v1767, %v1849
  %v1851 = vpop.f32.mrf.mxu0
  %v1852 = vadd.f32 %v1769, %v1851
  %v1853 = vpop.f32.mrf.mxu0
  %v1854 = vadd.f32 %v1771, %v1853
  %1855 = vmatprep.mubr.bf16.mxu0 %v1222
  %1856 = vmatmul.mubr.bf16.gmra.mxu0 %v1221
  %v1857 = vpop.f32.mrf.mxu0
  %v1858 = vadd.f32 %v1775, %v1857
  %v1859 = vpop.f32.mrf.mxu0
  %v1860 = vadd.f32 %v1777, %v1859
  %v1861 = vpop.f32.mrf.mxu0
  %v1862 = vadd.f32 %v1779, %v1861
  %v1863 = vpop.f32.mrf.mxu0
  %v1864 = vadd.f32 %v1781, %v1863
  %1865 = vmatprep.mubr.bf16.mxu0 %v1224
  %1866 = vmatmul.mubr.bf16.gmra.mxu0 %v1223
  %v1867 = vpop.f32.mrf.mxu0
  %v1868 = vadd.f32 %v1785, %v1867
  %v1869 = vpop.f32.mrf.mxu0
  %v1870 = vadd.f32 %v1787, %v1869
  %v1871 = vpop.f32.mrf.mxu0
  %v1872 = vadd.f32 %v1789, %v1871
  %v1873 = vpop.f32.mrf.mxu0
  %v1874 = vadd.f32 %v1791, %v1873
  %1875 = vmatprep.mubr.bf16.mxu0 %v1226
  %1876 = vmatmul.mubr.bf16.gmra.mxu0 %v1225
  %v1877 = vpop.f32.mrf.mxu0
  %v1878 = vadd.f32 %v1795, %v1877
  %v1879 = vpop.f32.mrf.mxu0
  %v1880 = vadd.f32 %v1797, %v1879
  %v1881 = vpop.f32.mrf.mxu0
  %v1882 = vadd.f32 %v1799, %v1881
  %v1883 = vpop.f32.mrf.mxu0
  %v1884 = vadd.f32 %v1801, %v1883
  %1885 = vdwg.mxu0
  %1886 = vmatprep.subr.bf16.mxu0 %v1639
  %1887 = vmatpush1.bf16.msra.mxu0 %v1638
  %1888 = vmatprep.subr.bf16.mxu0 %v1637
  %1889 = vmatpush1.bf16.msra.mxu0 %v1636
  %1890 = vmatprep.subr.bf16.mxu0 %v1635
  %1891 = vmatpush1.bf16.msra.mxu0 %v1634
  %1892 = vmatprep.subr.bf16.mxu0 %v1633
  %1893 = vmatpush1.bf16.msra.mxu0 %v1632
  %1894 = vmatprep.subr.bf16.mxu0 %v1631
  %1895 = vmatpush1.bf16.msra.mxu0 %v1630
  %1896 = vmatprep.subr.bf16.mxu0 %v1629
  %1897 = vmatpush1.bf16.msra.mxu0 %v1628
  %1898 = vmatprep.subr.bf16.mxu0 %v1627
  %1899 = vmatpush1.bf16.msra.mxu0 %v1626
  %1900 = vmatprep.subr.bf16.mxu0 %v1625
  %1901 = vmatpush1.bf16.msra.mxu0 %v1624
  %1902 = vmatprep.subr.bf16.mxu0 0
  %1903 = vmatpush2.bf16.msra.mxu0 0
  %1904 = vmatprep.subr.bf16.mxu0 0
  %1905 = vmatpush2.bf16.msra.mxu0 0
  %1906 = vmatprep.subr.bf16.mxu0 0
  %1907 = vmatpush2.bf16.msra.mxu0 0
  %1908 = vmatprep.subr.bf16.mxu0 0
  %1909 = vmatpush2.bf16.msra.mxu0 0
  %1910 = vmatprep.subr.bf16.mxu0 0
  %1911 = vmatpush2.bf16.msra.mxu0 0
  %1912 = vmatprep.subr.bf16.mxu0 0
  %1913 = vmatpush2.bf16.msra.mxu0 0
  %1914 = vmatprep.subr.bf16.mxu0 0
  %1915 = vmatpush2.bf16.msra.mxu0 0
  %1916 = vmatprep.subr.bf16.mxu0 0
  %1917 = vmatpush2.bf16.msra.mxu0 0
  %1918 = vmatprep.mubr.bf16.mxu0 0
  %1919 = vmatmul.mubr.bf16.gmra.mxu0 %v1219
  %v1920 = vpop.f32.mrf.mxu0
  %v1921 = vadd.f32 %v1838, %v1920
  %v1922 = vpop.f32.mrf.mxu0
  %v1923 = vadd.f32 %v1840, %v1922
  %v1924 = vpop.f32.mrf.mxu0
  %v1925 = vadd.f32 %v1842, %v1924
  %v1926 = vpop.f32.mrf.mxu0
  %v1927 = vadd.f32 %v1844, %v1926
  %1928 = vmatprep.mubr.bf16.mxu0 0
  %1929 = vmatmul.mubr.bf16.gmra.mxu0 %v1221
  %v1930 = vpop.f32.mrf.mxu0
  %v1931 = vadd.f32 %v1848, %v1930
  %v1932 = vpop.f32.mrf.mxu0
  %v1933 = vadd.f32 %v1850, %v1932
  %v1934 = vpop.f32.mrf.mxu0
  %v1935 = vadd.f32 %v1852, %v1934
  %v1936 = vpop.f32.mrf.mxu0
  %v1937 = vadd.f32 %v1854, %v1936
  %1938 = vmatprep.mubr.bf16.mxu0 0
  %1939 = vmatmul.mubr.bf16.gmra.mxu0 %v1223
  %v1940 = vpop.f32.mrf.mxu0
  %v1941 = vadd.f32 %v1858, %v1940
  %v1942 = vpop.f32.mrf.mxu0
  %v1943 = vadd.f32 %v1860, %v1942
  %v1944 = vpop.f32.mrf.mxu0
  %v1945 = vadd.f32 %v1862, %v1944
  %v1946 = vpop.f32.mrf.mxu0
  %v1947 = vadd.f32 %v1864, %v1946
  %1948 = vmatprep.mubr.bf16.mxu0 0
  %1949 = vmatmul.mubr.bf16.gmra.mxu0 %v1225
  %v1950 = vpop.f32.mrf.mxu0
  %v1951 = vadd.f32 %v1868, %v1950
  %v1952 = vpop.f32.mrf.mxu0
  %v1953 = vadd.f32 %v1870, %v1952
  %v1954 = vpop.f32.mrf.mxu0
  %v1955 = vadd.f32 %v1872, %v1954
  %v1956 = vpop.f32.mrf.mxu0
  %v1957 = vadd.f32 %v1874, %v1956
  %1958 = vmatprep.mubr.bf16.mxu0 0
  %1959 = vmatmul.mubr.bf16.gmra.mxu0 %v1227
  %v1960 = vpop.f32.mrf.mxu0
  %v1961 = vadd.f32 %v1878, %v1960
  %v1962 = vpop.f32.mrf.mxu0
  %v1963 = vadd.f32 %v1880, %v1962
  %v1964 = vpop.f32.mrf.mxu0
  %v1965 = vadd.f32 %v1882, %v1964
  %v1966 = vpop.f32.mrf.mxu0
  %v1967 = vadd.f32 %v1884, %v1966
  %1968 = vdwg.mxu0
  %v1969 = vmax.f32 %v1921, 0.0
  %v1970 = vmax.f32 %v1923, 0.0
  %v1971 = vmax.f32 %v1925, 0.0
  %v1972 = vmax.f32 %v1927, 0.0
  %v1973 = vmax.f32 %v1931, 0.0
  %v1974 = vmax.f32 %v1933, 0.0
  %v1975 = vmax.f32 %v1935, 0.0
  %v1976 = vmax.f32 %v1937, 0.0
  %v1977 = vmax.f32 %v1941, 0.0
  %v1978 = vmax.f32 %v1943, 0.0
  %v1979 = vmax.f32 %v1945, 0.0
  %v1980 = vmax.f32 %v1947, 0.0
  %v1981 = vmax.f32 %v1951, 0.0
  %v1982 = vmax.f32 %v1953, 0.0
  %v1983 = vmax.f32 %v1955, 0.0
  %v1984 = vmax.f32 %v1957, 0.0
  %v1985 = vmax.f32 %v1961, 0.0
  %v1986 = vmax.f32 %v1963, 0.0
  %v1987 = vmax.f32 %v1965, 0.0
  %v1988 = vmax.f32 %v1967, 0.0
  %v1989 = vmax.f32 %v1969, %v1970
  %v1990 = vmax.f32 %v1971, %v1972
  %v1991 = vmax.f32 %v1973, %v1974
  %v1992 = vmax.f32 %v1975, %v1976
  %v1993 = vmax.f32 %v1977, %v1978
  %v1994 = vmax.f32 %v1979, %v1980
  %v1995 = vmax.f32 %v1981, %v1982
  %v1996 = vmax.f32 %v1983, %v1984
  %v1997 = vmax.f32 %v1985, %v1986
  %v1998 = vmax.f32 %v1987, %v1988
  %v1999 = vmax.f32 %v1989, %v1990
  %v2000 = vmax.f32 %v1991, %v1992
  %v2001 = vmax.f32 %v1993, %v1994
  %v2002 = vmax.f32 %v1995, %v1996
  %v2003 = vmax.f32 %v1997, %v1998
  %v2004 = vpack.c.bf16 %v1999, %v1999
  %v2005 = vpack.c.bf16 %v2000, %v2000
  %v2006 = vpack.c.bf16 %v2001, %v2001
  %v2007 = vpack.c.bf16 %v2002, %v2002
  %v2008 = vpack.c.bf16 %v2003, %v2003
  %v2009 = vld [vmem:[%s5] sm:$0xf]
  %v2010 = vld [vmem:[%s5 + $0x4] sm:$0xf]
  %v2011 = vld [vmem:[%s5 + $0x8] sm:$0xf]
  %v2012 = vld [vmem:[%s5 + $0xc] sm:$0xf]
  %v2013 = vld [vmem:[%s5 + $0x10] sm:$0xf]
  %v2014 = vld [vmem:[%s5 + $0x14] sm:$0xf]
  %v2015 = vld [vmem:[%s5 + $0x18] sm:$0xf]
  %v2016 = vld [vmem:[%s5 + $0x1c] sm:$0xf]
  %v2017 = vld [vmem:[%s5 + $0x20] sm:$0xf]
  %v2018 = vld [vmem:[%s5 + $0x24] sm:$0xf]
  %v2019 = vld [vmem:[%s5 + $0x28] sm:$0xf]
  %v2020 = vld [vmem:[%s5 + $0x2c] sm:$0xf]
  %v2021 = vld [vmem:[%s5 + $0x30] sm:$0xf]
  %v2022 = vld [vmem:[%s5 + $0x34] sm:$0xf]
  %v2023 = vld [vmem:[%s5 + $0x38] sm:$0xf]
  %v2024 = vld [vmem:[%s5 + $0x3c] sm:$0xf]
  %v2025 = vld [vmem:[%s5 + $0x40] sm:$0xf]
  %v2026 = vld [vmem:[%s5 + $0x44] sm:$0xf]
  %v2027 = vld [vmem:[%s5 + $0x48] sm:$0xf]
  %v2028 = vld [vmem:[%s5 + $0x4c] sm:$0xf]
  %v2029 = vld [vmem:[%s5 + $0x50] sm:$0xf]
  %v2030 = vld [vmem:[%s5 + $0x54] sm:$0xf]
  %v2031 = vld [vmem:[%s5 + $0x58] sm:$0xf]
  %v2032 = vld [vmem:[%s5 + $0x5c] sm:$0xf]
  %v2033 = vld [vmem:[%s5 + $0x60] sm:$0xf]
  %v2034 = vld [vmem:[%s5 + $0x64] sm:$0xf]
  %v2035 = vld [vmem:[%s5 + $0x68] sm:$0xf]
  %v2036 = vld [vmem:[%s5 + $0x6c] sm:$0xf]
  %v2037 = vld [vmem:[%s5 + $0x70] sm:$0xf]
  %v2038 = vld [vmem:[%s5 + $0x74] sm:$0xf]
  %v2039 = vld [vmem:[%s5 + $0x78] sm:$0xf]
  %v2040 = vld [vmem:[%s5 + $0x7c] sm:$0xf]
  %v2041 = vld [vmem:[%s5 + $0x80] sm:$0xf]
  %v2042 = vld [vmem:[%s5 + $0x84] sm:$0xf]
  %v2043 = vld [vmem:[%s5 + $0x88] sm:$0xf]
  %v2044 = vld [vmem:[%s5 + $0x8c] sm:$0xf]
  %v2045 = vld [vmem:[%s5 + $0x90] sm:$0xf]
  %v2046 = vld [vmem:[%s5 + $0x94] sm:$0xf]
  %v2047 = vld [vmem:[%s5 + $0x98] sm:$0xf]
  %v2048 = vld [vmem:[%s5 + $0x9c] sm:$0xf]
  %v2049 = vld [vmem:[%s5 + $0xa0] sm:$0xf]
  %v2050 = vld [vmem:[%s5 + $0xa4] sm:$0xf]
  %v2051 = vld [vmem:[%s5 + $0xa8] sm:$0xf]
  %v2052 = vld [vmem:[%s5 + $0xac] sm:$0xf]
  %v2053 = vld [vmem:[%s5 + $0xb0] sm:$0xf]
  %v2054 = vld [vmem:[%s5 + $0xb4] sm:$0xf]
  %v2055 = vld [vmem:[%s5 + $0xb8] sm:$0xf]
  %v2056 = vld [vmem:[%s5 + $0xbc] sm:$0xf]
  %v2057 = vld [vmem:[%s5 + $0xc0] sm:$0xf]
  %v2058 = vld [vmem:[%s5 + $0xc4] sm:$0xf]
  %v2059 = vld [vmem:[%s5 + $0xc8] sm:$0xf]
  %v2060 = vld [vmem:[%s5 + $0xcc] sm:$0xf]
  %v2061 = vld [vmem:[%s5 + $0xd0] sm:$0xf]
  %v2062 = vld [vmem:[%s5 + $0xd4] sm:$0xf]
  %v2063 = vld [vmem:[%s5 + $0xd8] sm:$0xf]
  %v2064 = vld [vmem:[%s5 + $0xdc] sm:$0xf]
  %v2065 = vld [vmem:[%s5 + $0xe0] sm:$0xf]
  %v2066 = vld [vmem:[%s5 + $0xe4] sm:$0xf]
  %v2067 = vld [vmem:[%s5 + $0xe8] sm:$0xf]
  %v2068 = vld [vmem:[%s5 + $0xec] sm:$0xf]
  %v2069 = vld [vmem:[%s5 + $0xf0] sm:$0xf]
  %v2070 = vld [vmem:[%s5 + $0xf4] sm:$0xf]
  %v2071 = vld [vmem:[%s5 + $0xf8] sm:$0xf]
  %v2072 = vld [vmem:[%s5 + $0xfc] sm:$0xf]
  %v2073 = vld [vmem:[%s5 + $0x100] sm:$0xf]
  %v2074 = vld [vmem:[%s5 + $0x104] sm:$0xf]
  %v2075 = vld [vmem:[%s5 + $0x108] sm:$0xf]
  %v2076 = vld [vmem:[%s5 + $0x10c] sm:$0xf]
  %v2077 = vld [vmem:[%s5 + $0x110] sm:$0xf]
  %v2078 = vld [vmem:[%s5 + $0x114] sm:$0xf]
  %v2079 = vld [vmem:[%s5 + $0x118] sm:$0xf]
  %v2080 = vld [vmem:[%s5 + $0x11c] sm:$0xf]
  %v2081 = vld [vmem:[%s5 + $0x120] sm:$0xf]
  %v2082 = vld [vmem:[%s5 + $0x124] sm:$0xf]
  %v2083 = vld [vmem:[%s5 + $0x128] sm:$0xf]
  %v2084 = vld [vmem:[%s5 + $0x12c] sm:$0xf]
  %v2085 = vld [vmem:[%s5 + $0x130] sm:$0xf]
  %v2086 = vld [vmem:[%s5 + $0x134] sm:$0xf]
  %v2087 = vld [vmem:[%s5 + $0x138] sm:$0xf]
  %v2088 = vld [vmem:[%s5 + $0x13c] sm:$0xf]
  %v2089 = vld [vmem:[%s6] sm:$0x1]
  %v2091 = vlaneseq
  %v2092 = vshrl.u32 %v2091, 7
  %v2093 = vsub.s32 0, %v2092
  %v2094 = vrot.slane %v2089, %v2093
  %v2176 = vunpack.c.l.b16 %v2009
  %v2177 = vunpack.c.l.b16 %v2010
  %v2178 = vunpack.c.l.b16 %v2011
  %v2179 = vunpack.c.l.b16 %v2012
  %v2180 = vunpack.c.l.b16 %v2013
  %v2181 = vunpack.c.l.b16 %v2014
  %v2182 = vunpack.c.l.b16 %v2015
  %v2183 = vunpack.c.l.b16 %v2016
  %v2184 = vunpack.c.l.b16 %v2017
  %v2185 = vunpack.c.l.b16 %v2018
  %v2186 = vunpack.c.l.b16 %v2019
  %v2187 = vunpack.c.l.b16 %v2020
  %v2188 = vunpack.c.l.b16 %v2021
  %v2189 = vunpack.c.l.b16 %v2022
  %v2190 = vunpack.c.l.b16 %v2023
  %v2191 = vunpack.c.l.b16 %v2024
  %v2192 = vunpack.c.l.b16 %v2025
  %v2193 = vunpack.c.l.b16 %v2026
  %v2194 = vunpack.c.l.b16 %v2027
  %v2195 = vunpack.c.l.b16 %v2028
  %v2196 = vunpack.c.l.b16 %v2029
  %v2197 = vunpack.c.l.b16 %v2030
  %v2198 = vunpack.c.l.b16 %v2031
  %v2199 = vunpack.c.l.b16 %v2032
  %v2200 = vunpack.c.l.b16 %v2033
  %v2201 = vunpack.c.l.b16 %v2034
  %v2202 = vunpack.c.l.b16 %v2035
  %v2203 = vunpack.c.l.b16 %v2036
  %v2204 = vunpack.c.l.b16 %v2037
  %v2205 = vunpack.c.l.b16 %v2038
  %v2206 = vunpack.c.l.b16 %v2039
  %v2207 = vunpack.c.l.b16 %v2040
  %v2208 = vunpack.c.l.b16 %v2041
  %v2209 = vunpack.c.l.b16 %v2042
  %v2210 = vunpack.c.l.b16 %v2043
  %v2211 = vunpack.c.l.b16 %v2044
  %v2212 = vunpack.c.l.b16 %v2045
  %v2213 = vunpack.c.l.b16 %v2046
  %v2214 = vunpack.c.l.b16 %v2047
  %v2215 = vunpack.c.l.b16 %v2048
  %v2216 = vunpack.c.l.b16 %v2049
  %v2217 = vunpack.c.l.b16 %v2050
  %v2218 = vunpack.c.l.b16 %v2051
  %v2219 = vunpack.c.l.b16 %v2052
  %v2220 = vunpack.c.l.b16 %v2053
  %v2221 = vunpack.c.l.b16 %v2054
  %v2222 = vunpack.c.l.b16 %v2055
  %v2223 = vunpack.c.l.b16 %v2056
  %v2224 = vunpack.c.l.b16 %v2057
  %v2225 = vunpack.c.l.b16 %v2058
  %v2226 = vunpack.c.l.b16 %v2059
  %v2227 = vunpack.c.l.b16 %v2060
  %v2228 = vunpack.c.l.b16 %v2061
  %v2229 = vunpack.c.l.b16 %v2062
  %v2230 = vunpack.c.l.b16 %v2063
  %v2231 = vunpack.c.l.b16 %v2064
  %v2232 = vunpack.c.l.b16 %v2065
  %v2233 = vunpack.c.l.b16 %v2066
  %v2234 = vunpack.c.l.b16 %v2067
  %v2235 = vunpack.c.l.b16 %v2068
  %v2236 = vunpack.c.l.b16 %v2069
  %v2237 = vunpack.c.l.b16 %v2070
  %v2238 = vunpack.c.l.b16 %v2071
  %v2239 = vunpack.c.l.b16 %v2072
  %v2240 = vunpack.c.l.b16 %v2073
  %v2241 = vunpack.c.l.b16 %v2074
  %v2242 = vunpack.c.l.b16 %v2075
  %v2243 = vunpack.c.l.b16 %v2076
  %v2244 = vunpack.c.l.b16 %v2077
  %v2245 = vunpack.c.l.b16 %v2078
  %v2246 = vunpack.c.l.b16 %v2079
  %v2247 = vunpack.c.l.b16 %v2080
  %v2248 = vunpack.c.l.b16 %v2081
  %v2249 = vunpack.c.l.b16 %v2082
  %v2250 = vunpack.c.l.b16 %v2083
  %v2251 = vunpack.c.l.b16 %v2084
  %v2252 = vunpack.c.l.b16 %v2085
  %v2253 = vunpack.c.l.b16 %v2086
  %v2254 = vunpack.c.l.b16 %v2087
  %v2255 = vunpack.c.l.b16 %v2088
  %v2256 = vpack.c.b16 %v2177, %v2176
  %v2257 = vpack.c.b16 %v2179, %v2178
  %v2258 = vpack.c.b16 %v2181, %v2180
  %v2259 = vpack.c.b16 %v2183, %v2182
  %v2260 = vpack.c.b16 %v2185, %v2184
  %v2261 = vpack.c.b16 %v2187, %v2186
  %v2262 = vpack.c.b16 %v2189, %v2188
  %v2263 = vpack.c.b16 %v2191, %v2190
  %v2264 = vpack.c.b16 %v2193, %v2192
  %v2265 = vpack.c.b16 %v2195, %v2194
  %v2266 = vpack.c.b16 %v2197, %v2196
  %v2267 = vpack.c.b16 %v2199, %v2198
  %v2268 = vpack.c.b16 %v2201, %v2200
  %v2269 = vpack.c.b16 %v2203, %v2202
  %v2270 = vpack.c.b16 %v2205, %v2204
  %v2271 = vpack.c.b16 %v2207, %v2206
  %v2272 = vpack.c.b16 %v2209, %v2208
  %v2273 = vpack.c.b16 %v2211, %v2210
  %v2274 = vpack.c.b16 %v2213, %v2212
  %v2275 = vpack.c.b16 %v2215, %v2214
  %v2276 = vpack.c.b16 %v2217, %v2216
  %v2277 = vpack.c.b16 %v2219, %v2218
  %v2278 = vpack.c.b16 %v2221, %v2220
  %v2279 = vpack.c.b16 %v2223, %v2222
  %v2280 = vpack.c.b16 %v2225, %v2224
  %v2281 = vpack.c.b16 %v2227, %v2226
  %v2282 = vpack.c.b16 %v2229, %v2228
  %v2283 = vpack.c.b16 %v2231, %v2230
  %v2284 = vpack.c.b16 %v2233, %v2232
  %v2285 = vpack.c.b16 %v2235, %v2234
  %v2286 = vpack.c.b16 %v2237, %v2236
  %v2287 = vpack.c.b16 %v2239, %v2238
  %v2288 = vpack.c.b16 %v2241, %v2240
  %v2289 = vpack.c.b16 %v2243, %v2242
  %v2290 = vpack.c.b16 %v2245, %v2244
  %v2291 = vpack.c.b16 %v2247, %v2246
  %v2292 = vpack.c.b16 %v2249, %v2248
  %v2293 = vpack.c.b16 %v2251, %v2250
  %v2294 = vpack.c.b16 %v2253, %v2252
  %v2295 = vpack.c.b16 %v2255, %v2254
  %2336 = vmatprep.subr.bf16.mxu0 0
  %2337 = vmatpush1.bf16.msra.mxu0 %v2263
  %2338 = vmatprep.subr.bf16.mxu0 0
  %2339 = vmatpush1.bf16.msra.mxu0 %v2262
  %2340 = vmatprep.subr.bf16.mxu0 0
  %2341 = vmatpush1.bf16.msra.mxu0 %v2261
  %2342 = vmatprep.subr.bf16.mxu0 0
  %2343 = vmatpush1.bf16.msra.mxu0 %v2260
  %2344 = vmatprep.subr.bf16.mxu0 0
  %2345 = vmatpush1.bf16.msra.mxu0 %v2259
  %2346 = vmatprep.subr.bf16.mxu0 0
  %2347 = vmatpush1.bf16.msra.mxu0 %v2258
  %2348 = vmatprep.subr.bf16.mxu0 0
  %2349 = vmatpush1.bf16.msra.mxu0 %v2257
  %2350 = vmatprep.subr.bf16.mxu0 0
  %2351 = vmatpush1.bf16.msra.mxu0 %v2256
  %2352 = vmatprep.subr.bf16.mxu0 0
  %2353 = vmatpush2.bf16.msra.mxu0 %v2271
  %2354 = vmatprep.subr.bf16.mxu0 0
  %2355 = vmatpush2.bf16.msra.mxu0 %v2270
  %2356 = vmatprep.subr.bf16.mxu0 0
  %2357 = vmatpush2.bf16.msra.mxu0 %v2269
  %2358 = vmatprep.subr.bf16.mxu0 0
  %2359 = vmatpush2.bf16.msra.mxu0 %v2268
  %2360 = vmatprep.subr.bf16.mxu0 0
  %2361 = vmatpush2.bf16.msra.mxu0 %v2267
  %2362 = vmatprep.subr.bf16.mxu0 0
  %2363 = vmatpush2.bf16.msra.mxu0 %v2266
  %2364 = vmatprep.subr.bf16.mxu0 0
  %2365 = vmatpush2.bf16.msra.mxu0 %v2265
  %2366 = vmatprep.subr.bf16.mxu0 0
  %2367 = vmatpush2.bf16.msra.mxu0 %v2264
  %2368 = vmatprep.mubr.bf16.mxu0 %v2005
  %2369 = vmatmul.mubr.bf16.gmra.mxu0 %v2004
  %v2370 = vpop.f32.mrf.mxu0
  %v2371 = vadd.f32 %v2094, %v2370
  %v2372 = vpop.f32.mrf.mxu0
  %v2373 = vpop.f32.mrf.mxu0
  %v2374 = vpop.f32.mrf.mxu0
  %2375 = vdwg.mxu0
  %2376 = vmatprep.subr.bf16.mxu0 0
  %2377 = vmatpush1.bf16.msra.mxu0 %v2279
  %2378 = vmatprep.subr.bf16.mxu0 0
  %2379 = vmatpush1.bf16.msra.mxu0 %v2278
  %2380 = vmatprep.subr.bf16.mxu0 0
  %2381 = vmatpush1.bf16.msra.mxu0 %v2277
  %2382 = vmatprep.subr.bf16.mxu0 0
  %2383 = vmatpush1.bf16.msra.mxu0 %v2276
  %2384 = vmatprep.subr.bf16.mxu0 0
  %2385 = vmatpush1.bf16.msra.mxu0 %v2275
  %2386 = vmatprep.subr.bf16.mxu0 0
  %2387 = vmatpush1.bf16.msra.mxu0 %v2274
  %2388 = vmatprep.subr.bf16.mxu0 0
  %2389 = vmatpush1.bf16.msra.mxu0 %v2273
  %2390 = vmatprep.subr.bf16.mxu0 0
  %2391 = vmatpush1.bf16.msra.mxu0 %v2272
  %2392 = vmatprep.subr.bf16.mxu0 0
  %2393 = vmatpush2.bf16.msra.mxu0 %v2287
  %2394 = vmatprep.subr.bf16.mxu0 0
  %2395 = vmatpush2.bf16.msra.mxu0 %v2286
  %2396 = vmatprep.subr.bf16.mxu0 0
  %2397 = vmatpush2.bf16.msra.mxu0 %v2285
  %2398 = vmatprep.subr.bf16.mxu0 0
  %2399 = vmatpush2.bf16.msra.mxu0 %v2284
  %2400 = vmatprep.subr.bf16.mxu0 0
  %2401 = vmatpush2.bf16.msra.mxu0 %v2283
  %2402 = vmatprep.subr.bf16.mxu0 0
  %2403 = vmatpush2.bf16.msra.mxu0 %v2282
  %2404 = vmatprep.subr.bf16.mxu0 0
  %2405 = vmatpush2.bf16.msra.mxu0 %v2281
  %2406 = vmatprep.subr.bf16.mxu0 0
  %2407 = vmatpush2.bf16.msra.mxu0 %v2280
  %2408 = vmatprep.mubr.bf16.mxu0 %v2007
  %2409 = vmatmul.mubr.bf16.gmra.mxu0 %v2006
  %v2410 = vpop.f32.mrf.mxu0
  %v2411 = vadd.f32 %v2371, %v2410
  %v2412 = vpop.f32.mrf.mxu0
  %v2413 = vpop.f32.mrf.mxu0
  %v2414 = vpop.f32.mrf.mxu0
  %2415 = vdwg.mxu0
  %2416 = vmatprep.subr.bf16.mxu0 0
  %2417 = vmatpush1.bf16.msra.mxu0 %v2295
  %2418 = vmatprep.subr.bf16.mxu0 0
  %2419 = vmatpush1.bf16.msra.mxu0 %v2294
  %2420 = vmatprep.subr.bf16.mxu0 0
  %2421 = vmatpush1.bf16.msra.mxu0 %v2293
  %2422 = vmatprep.subr.bf16.mxu0 0
  %2423 = vmatpush1.bf16.msra.mxu0 %v2292
  %2424 = vmatprep.subr.bf16.mxu0 0
  %2425 = vmatpush1.bf16.msra.mxu0 %v2291
  %2426 = vmatprep.subr.bf16.mxu0 0
  %2427 = vmatpush1.bf16.msra.mxu0 %v2290
  %2428 = vmatprep.subr.bf16.mxu0 0
  %2429 = vmatpush1.bf16.msra.mxu0 %v2289
  %2430 = vmatprep.subr.bf16.mxu0 0
  %2431 = vmatpush1.bf16.msra.mxu0 %v2288
  %2432 = vmatprep.subr.bf16.mxu0 0
  %2433 = vmatpush2.bf16.msra.mxu0 0
  %2434 = vmatprep.subr.bf16.mxu0 0
  %2435 = vmatpush2.bf16.msra.mxu0 0
  %2436 = vmatprep.subr.bf16.mxu0 0
  %2437 = vmatpush2.bf16.msra.mxu0 0
  %2438 = vmatprep.subr.bf16.mxu0 0
  %2439 = vmatpush2.bf16.msra.mxu0 0
  %2440 = vmatprep.subr.bf16.mxu0 0
  %2441 = vmatpush2.bf16.msra.mxu0 0
  %2442 = vmatprep.subr.bf16.mxu0 0
  %2443 = vmatpush2.bf16.msra.mxu0 0
  %2444 = vmatprep.subr.bf16.mxu0 0
  %2445 = vmatpush2.bf16.msra.mxu0 0
  %2446 = vmatprep.subr.bf16.mxu0 0
  %2447 = vmatpush2.bf16.msra.mxu0 0
  %2448 = vmatprep.mubr.bf16.mxu0 0
  %2449 = vmatmul.mubr.bf16.gmra.mxu0 %v2008
  %v2450 = vpop.f32.mrf.mxu0
  %v2451 = vadd.f32 %v2411, %v2450
  %v2452 = vpop.f32.mrf.mxu0
  %v2453 = vpop.f32.mrf.mxu0
  %v2454 = vpop.f32.mrf.mxu0
  %2455 = vdwg.mxu0
  %v2456 = vmax.f32 %v2451, 0.0
  %v2457 = vld [vmem:[%s7] sm:$0xff]
  %v2458 = vld [vmem:[%s7 + $0x8] sm:$0xff]
  %v2459 = vld [vmem:[%s7 + $0x10] sm:$0xff]
  %v2460 = vld [vmem:[%s7 + $0x18] sm:$0xff]
  %v2461 = vld [vmem:[%s7 + $0x20] sm:$0xff]
  %v2462 = vld [vmem:[%s7 + $0x28] sm:$0xff]
  %v2463 = vld [vmem:[%s7 + $0x30] sm:$0xff]
  %v2464 = vld [vmem:[%s7 + $0x38] sm:$0xff]
  %v2465 = vld [vmem:[%s7 + $0x40] sm:$0xff]
  %v2466 = vld [vmem:[%s7 + $0x48] sm:$0xff]
  %v2467 = vld [vmem:[%s7 + $0x50] sm:$0xff]
  %v2468 = vld [vmem:[%s7 + $0x58] sm:$0xff]
  %v2469 = vld [vmem:[%s7 + $0x60] sm:$0xff]
  %v2470 = vld [vmem:[%s7 + $0x68] sm:$0xff]
  %v2471 = vld [vmem:[%s7 + $0x70] sm:$0xff]
  %v2472 = vld [vmem:[%s7 + $0x78] sm:$0xff]
  %v2473 = vld [vmem:[%s8] sm:$0x1]
  %v2475 = vlaneseq
  %v2476 = vshrl.u32 %v2475, 7
  %v2477 = vsub.s32 0, %v2476
  %v2478 = vrot.slane %v2473, %v2477
  %2480 = vmatprep.subr.mxu0 0.0
  %2481 = vmatpush1.msra.mxu0 %v2472
  %2482 = vmatprep.subr.mxu0 0.0
  %2483 = vmatpush1.msra.mxu0 %v2471
  %2484 = vmatprep.subr.mxu0 0.0
  %2485 = vmatpush1.msra.mxu0 %v2470
  %2486 = vmatprep.subr.mxu0 0.0
  %2487 = vmatpush1.msra.mxu0 %v2469
  %2488 = vmatprep.subr.mxu0 0.0
  %2489 = vmatpush1.msra.mxu0 %v2468
  %2490 = vmatprep.subr.mxu0 0.0
  %2491 = vmatpush1.msra.mxu0 %v2467
  %2492 = vmatprep.subr.mxu0 0.0
  %2493 = vmatpush1.msra.mxu0 %v2466
  %2494 = vmatprep.subr.mxu0 0.0
  %2495 = vmatpush1.msra.mxu0 %v2465
  %2496 = vmatprep.subr.mxu0 0.0
  %2497 = vmatpush1.msra.mxu0 %v2464
  %2498 = vmatprep.subr.mxu0 0.0
  %2499 = vmatpush1.msra.mxu0 %v2463
  %2500 = vmatprep.subr.mxu0 0.0
  %2501 = vmatpush1.msra.mxu0 %v2462
  %2502 = vmatprep.subr.mxu0 0.0
  %2503 = vmatpush1.msra.mxu0 %v2461
  %2504 = vmatprep.subr.mxu0 0.0
  %2505 = vmatpush1.msra.mxu0 %v2460
  %2506 = vmatprep.subr.mxu0 0.0
  %2507 = vmatpush1.msra.mxu0 %v2459
  %2508 = vmatprep.subr.mxu0 0.0
  %2509 = vmatpush1.msra.mxu0 %v2458
  %2510 = vmatprep.subr.mxu0 0.0
  %2511 = vmatpush1.msra.mxu0 %v2457
  %2512 = vmatprep.subr.mxu0 0.0
  %2513 = vmatpush2.msra.mxu0 0.0
  %2514 = vmatprep.subr.mxu0 0.0
  %2515 = vmatpush2.msra.mxu0 0.0
  %2516 = vmatprep.subr.mxu0 0.0
  %2517 = vmatpush2.msra.mxu0 0.0
  %2518 = vmatprep.subr.mxu0 0.0
  %2519 = vmatpush2.msra.mxu0 0.0
  %2520 = vmatprep.subr.mxu0 0.0
  %2521 = vmatpush2.msra.mxu0 0.0
  %2522 = vmatprep.subr.mxu0 0.0
  %2523 = vmatpush2.msra.mxu0 0.0
  %2524 = vmatprep.subr.mxu0 0.0
  %2525 = vmatpush2.msra.mxu0 0.0
  %2526 = vmatprep.subr.mxu0 0.0
  %2527 = vmatpush2.msra.mxu0 0.0
  %2528 = vmatprep.subr.mxu0 0.0
  %2529 = vmatpush2.msra.mxu0 0.0
  %2530 = vmatprep.subr.mxu0 0.0
  %2531 = vmatpush2.msra.mxu0 0.0
  %2532 = vmatprep.subr.mxu0 0.0
  %2533 = vmatpush2.msra.mxu0 0.0
  %2534 = vmatprep.subr.mxu0 0.0
  %2535 = vmatpush2.msra.mxu0 0.0
  %2536 = vmatprep.subr.mxu0 0.0
  %2537 = vmatpush2.msra.mxu0 0.0
  %2538 = vmatprep.subr.mxu0 0.0
  %2539 = vmatpush2.msra.mxu0 0.0
  %2540 = vmatprep.subr.mxu0 0.0
  %2541 = vmatpush2.msra.mxu0 0.0
  %2542 = vmatprep.subr.mxu0 0.0
  %2543 = vmatpush2.msra.mxu0 0.0
  %2544 = vmatprep.mubr.f32.mxu0 0.0
  %2545 = vmatmul.mubr.f32.gmra.mxu0 %v2456
  %v2546 = vpop.f32.mrf.mxu0
  %v2547 = vadd.f32 %v2478, %v2546
  %v2548 = vpop.f32.mrf.mxu0
  %2549 = vdwg.mxu0
  %v2550 = vmax.f32 %v2547, 0.0
  %v2551 = vld [vmem:[%s9] sm:$0xff]
  %v2552 = vld [vmem:[%s9 + $0x8] sm:$0xff]
  %v2553 = vld [vmem:[%s9 + $0x10] sm:$0xff]
  %v2554 = vld [vmem:[%s9 + $0x18] sm:$0xff]
  %v2555 = vld [vmem:[%s9 + $0x20] sm:$0xff]
  %v2556 = vld [vmem:[%s9 + $0x28] sm:$0xff]
  %v2557 = vld [vmem:[%s9 + $0x30] sm:$0xff]
  %v2558 = vld [vmem:[%s9 + $0x38] sm:$0xff]
  %v2559 = vld [vmem:[%s9 + $0x40] sm:$0xff]
  %v2560 = vld [vmem:[%s9 + $0x48] sm:$0xff]
  %v2561 = vld [vmem:[%s9 + $0x50] sm:$0xff]
  %v2562 = vld [vmem:[%s9 + $0x58] sm:$0xff]
  %v2563 = vld [vmem:[%s9 + $0x60] sm:$0xff]
  %v2564 = vld [vmem:[%s9 + $0x68] sm:$0xff]
  %v2565 = vld [vmem:[%s9 + $0x70] sm:$0xff]
  %v2566 = vld [vmem:[%s9 + $0x78] sm:$0xff]
  %v2567 = vld [vmem:[%s10] sm:$0x1]
  %v2569 = vlaneseq
  %v2570 = vshrl.u32 %v2569, 7
  %v2571 = vsub.s32 0, %v2570
  %v2572 = vrot.slane %v2567, %v2571
  %2574 = vmatprep.subr.mxu0 0.0
  %2575 = vmatpush1.msra.mxu0 %v2566
  %2576 = vmatprep.subr.mxu0 0.0
  %2577 = vmatpush1.msra.mxu0 %v2565
  %2578 = vmatprep.subr.mxu0 0.0
  %2579 = vmatpush1.msra.mxu0 %v2564
  %2580 = vmatprep.subr.mxu0 0.0
  %2581 = vmatpush1.msra.mxu0 %v2563
  %2582 = vmatprep.subr.mxu0 0.0
  %2583 = vmatpush1.msra.mxu0 %v2562
  %2584 = vmatprep.subr.mxu0 0.0
  %2585 = vmatpush1.msra.mxu0 %v2561
  %2586 = vmatprep.subr.mxu0 0.0
  %2587 = vmatpush1.msra.mxu0 %v2560
  %2588 = vmatprep.subr.mxu0 0.0
  %2589 = vmatpush1.msra.mxu0 %v2559
  %2590 = vmatprep.subr.mxu0 0.0
  %2591 = vmatpush1.msra.mxu0 %v2558
  %2592 = vmatprep.subr.mxu0 0.0
  %2593 = vmatpush1.msra.mxu0 %v2557
  %2594 = vmatprep.subr.mxu0 0.0
  %2595 = vmatpush1.msra.mxu0 %v2556
  %2596 = vmatprep.subr.mxu0 0.0
  %2597 = vmatpush1.msra.mxu0 %v2555
  %2598 = vmatprep.subr.mxu0 0.0
  %2599 = vmatpush1.msra.mxu0 %v2554
  %2600 = vmatprep.subr.mxu0 0.0
  %2601 = vmatpush1.msra.mxu0 %v2553
  %2602 = vmatprep.subr.mxu0 0.0
  %2603 = vmatpush1.msra.mxu0 %v2552
  %2604 = vmatprep.subr.mxu0 0.0
  %2605 = vmatpush1.msra.mxu0 %v2551
  %2606 = vmatprep.subr.mxu0 0.0
  %2607 = vmatpush2.msra.mxu0 0.0
  %2608 = vmatprep.subr.mxu0 0.0
  %2609 = vmatpush2.msra.mxu0 0.0
  %2610 = vmatprep.subr.mxu0 0.0
  %2611 = vmatpush2.msra.mxu0 0.0
  %2612 = vmatprep.subr.mxu0 0.0
  %2613 = vmatpush2.msra.mxu0 0.0
  %2614 = vmatprep.subr.mxu0 0.0
  %2615 = vmatpush2.msra.mxu0 0.0
  %2616 = vmatprep.subr.mxu0 0.0
  %2617 = vmatpush2.msra.mxu0 0.0
  %2618 = vmatprep.subr.mxu0 0.0
  %2619 = vmatpush2.msra.mxu0 0.0
  %2620 = vmatprep.subr.mxu0 0.0
  %2621 = vmatpush2.msra.mxu0 0.0
  %2622 = vmatprep.subr.mxu0 0.0
  %2623 = vmatpush2.msra.mxu0 0.0
  %2624 = vmatprep.subr.mxu0 0.0
  %2625 = vmatpush2.msra.mxu0 0.0
  %2626 = vmatprep.subr.mxu0 0.0
  %2627 = vmatpush2.msra.mxu0 0.0
  %2628 = vmatprep.subr.mxu0 0.0
  %2629 = vmatpush2.msra.mxu0 0.0
  %2630 = vmatprep.subr.mxu0 0.0
  %2631 = vmatpush2.msra.mxu0 0.0
  %2632 = vmatprep.subr.mxu0 0.0
  %2633 = vmatpush2.msra.mxu0 0.0
  %2634 = vmatprep.subr.mxu0 0.0
  %2635 = vmatpush2.msra.mxu0 0.0
  %2636 = vmatprep.subr.mxu0 0.0
  %2637 = vmatpush2.msra.mxu0 0.0
  %2638 = vmatprep.mubr.f32.mxu0 0.0
  %2639 = vmatmul.mubr.f32.gmra.mxu0 %v2550
  %v2640 = vpop.f32.mrf.mxu0
  %v2641 = vadd.f32 %v2572, %v2640
  %v2642 = vpop.f32.mrf.mxu0
  %2643 = vdwg.mxu0
  %2644 = vst [vmem:[%s11] sm:$0xff] %v2641
  // Predicated region
  $region46: #{lenet_forward.1} parent=0 // pred_check
    _
  $region47: #{lenet_forward.1} parent=0 // pred_check_branch
    %2646 = sbr.rel (0) target = $region49
  $region48: #{lenet_forward.1} parent=0 // pred_region
    _
  $region49: #{lenet_forward.1} parent=0 // pred_fallthru
    _
  // Predicated region
  $region50: #{lenet_forward.1} parent=0 // pred_check
    _
  $region51: #{lenet_forward.1} parent=0 // pred_check_branch
    %2648 = sbr.rel (0) target = $region53
  $region52: #{lenet_forward.1} parent=0 // pred_region
    _
  $region53: #{lenet_forward.1} parent=0 // pred_fallthru
    _

</llo_original>
